<compile_context>
chip_gen: v6e
topology: v6e:2x2x1
jax: 0.10.0
libtpu: 0.0.40
codegen_flags: <defaults>
</compile_context>

<pallas_src>
import functools

import jax
import jax.numpy as jnp
from jax import lax
from jax.experimental import pallas as pl
from jax.experimental.pallas import tpu as pltpu


# -----------------------------------------------------------------------------
# Fused Pallas kernel: conv3x3 -> +time-bias -> SiLU -> conv3x3 (+bias)
# -----------------------------------------------------------------------------
def _fused_kernel(xp_ref, mask_ref, tb_ref, w1_ref, w2_ref, b2_ref,
                  out_ref, hpad_ref, *, H, W, Wpad, hidden):
    """One batch element per grid step.

    xp_ref   : (Cin, HW+2*Wpad)   bf16  flat NCHW image, zero lane-halo on both sides
    mask_ref : (2, HW)            bf16  row0 valid for dx=-1 (col>=1), row1 for dx=+1 (col<=W-2)
    tb_ref   : (hidden, 1)        f32   precomputed time bias (+ conv1 bias)
    w1_ref   : (9, hidden, Cin)   bf16  conv1 weights, tap-major, (out, in)
    w2_ref   : (9, Cout, hidden)  bf16  conv2 weights, tap-major, (out, in)
    b2_ref   : (Cout, 1)          f32   conv2 bias
    out_ref  : (Cout, HW)         f32   lane-dense output block (already NCHW-flat)
    hpad_ref : (hidden, HW+2*Wpad) bf16 VMEM scratch holding the intermediate h
    """
    HW = H * W
    f32 = jnp.float32

    mask_l = mask_ref[0:1, :]          # valid when dx == -1
    mask_r = mask_ref[1:2, :]          # valid when dx == +1

    def conv3x3(src_ref, w_ref, n_out):
        # 3x3 conv as 9 shifted-slice dots accumulated in f32.
        # Flat-index trick: source pixel of output p for tap (dy, dx) is
        # p + dy*W + dx; row overruns land in the zero halo, column wraps are
        # killed by the dx masks.
        acc = jnp.zeros((n_out, HW), f32)
        tap = 0
        for dy in (-1, 0, 1):
            for dx in (-1, 0, 1):
                start = Wpad + dy * W + dx
                t = src_ref[:, start:start + HW]          # (C_in_like, HW) bf16
                if dx == -1:
                    t = t * mask_l
                elif dx == 1:
                    t = t * mask_r
                acc = acc + jnp.dot(w_ref[tap], t,
                                    preferred_element_type=f32)
                tap += 1
        return acc

    # ---- stage 1: Cin -> hidden, + time bias, SiLU (all in f32) -------------
    acc1 = conv3x3(xp_ref, w1_ref, hidden) + tb_ref[...]       # (hidden, HW)
    h = acc1 * jax.nn.sigmoid(acc1)                            # SiLU

    # Stash h (bf16) in a flat, edge-padded VMEM scratch so stage 2's shifted
    # slices read zeros outside the image.  Pads re-zeroed every step so the
    # kernel is megacore-safe (no dependence on "first" grid step).
    zero_pad = jnp.zeros((hidden, Wpad), hpad_ref.dtype)
    hpad_ref[:, 0:Wpad] = zero_pad
    hpad_ref[:, Wpad + HW:Wpad + HW + Wpad] = zero_pad
    hpad_ref[:, Wpad:Wpad + HW] = h.astype(hpad_ref.dtype)

    # ---- stage 2: hidden -> Cout (h never leaves VMEM) -----------------------
    cout = out_ref.shape[0]
    acc2 = conv3x3(hpad_ref, w2_ref, cout) + b2_ref[...]       # (Cout, HW)
    out_ref[...] = acc2.astype(out_ref.dtype)


def _fused_forward(xp, mask, tb, w1, w2, b2, *, H, W, hidden, cout):
    B, cin, HWP = xp.shape
    HW = H * W
    Wpad = (HWP - HW) // 2
    kernel = functools.partial(_fused_kernel, H=H, W=W, Wpad=Wpad, hidden=hidden)
    return pl.pallas_call(
        kernel,
        out_shape=jax.ShapeDtypeStruct((B, cout, HW), jnp.float32),
        grid_spec=pltpu.PrefetchScalarGridSpec(
            num_scalar_prefetch=0,
            grid=(B,),
            in_specs=[
                pl.BlockSpec((None, cin, HWP), lambda b: (b, 0, 0)),   # x (flat, padded)
                pl.BlockSpec((2, HW), lambda b: (0, 0)),               # column masks
                pl.BlockSpec((None, hidden, 1), lambda b: (b, 0, 0)),  # time bias
                pl.BlockSpec((9, hidden, cin), lambda b: (0, 0, 0)),   # conv1 weights
                pl.BlockSpec((9, cout, hidden), lambda b: (0, 0, 0)),  # conv2 weights
                pl.BlockSpec((cout, 1), lambda b: (0, 0)),             # conv2 bias
            ],
            out_specs=pl.BlockSpec((None, cout, HW), lambda b: (b, 0, 0)),
            scratch_shapes=[pltpu.VMEM((hidden, HWP), jnp.bfloat16)],
        ),
        compiler_params=pltpu.CompilerParams(
            dimension_semantics=("parallel",)),
    )(xp, mask, tb, w1, w2, b2)


# -----------------------------------------------------------------------------
# RectifiedFlow (JAX/Pallas port)
# -----------------------------------------------------------------------------
class RectifiedFlow:
    def __init__(self, img_size, in_channels=4, hidden=32, T=1000,
                 embedding_size=2, resolution_multiplier=1, param_key=None):
        self.embedding_size = embedding_size
        self.img_size = img_size
        self.resolution_multiplier = resolution_multiplier
        self.N = T
        self.in_channels = in_channels
        self.hidden = hidden

        if param_key is None:
            param_key = jax.random.PRNGKey(42)
        k1, k2, k3 = jax.random.split(param_key, 3)
        C, E, Hd = in_channels, embedding_size, hidden

        w1 = jax.random.normal(k1, (3, 3, C, Hd), jnp.float32) / jnp.sqrt(9.0 * C)
        w2 = jax.random.normal(k3, (3, 3, Hd, C), jnp.float32) / jnp.sqrt(9.0 * Hd)
        # time MLP (kept f32; fused into the time bias outside the kernel)
        self.wt = jax.random.normal(k2, (E, Hd), jnp.float32) / jnp.sqrt(float(E))
        self.bt = jnp.zeros((1, Hd), jnp.float32)
        self.b1 = jnp.zeros((1, Hd), jnp.float32)           # conv1 bias
        self.b2 = jnp.zeros((C, 1), jnp.float32)            # conv2 bias (col vector)
        # bf16 MXU operands: tap-major, (out_channels, in_channels) per tap
        self.w1_b = jnp.transpose(w1, (0, 1, 3, 2)).reshape(9, Hd, C).astype(jnp.bfloat16)
        self.w2_b = jnp.transpose(w2, (0, 1, 3, 2)).reshape(9, C, Hd).astype(jnp.bfloat16)

    def t(self, ti):
        # PyTorch: ti.expand(B, embedding_size)
        return jnp.broadcast_to(ti, (ti.shape[0], self.embedding_size))

    def model(self, x_nchw, te):
        B, C, H, W = x_nchw.shape
        HW = H * W
        # Lane halo, rounded to 128 so the central region is lane-aligned.
        Wpad = ((W + 1 + 127) // 128) * 128

        # NCHW -> (B, C, HW) is a pure reshape (no transpose); bf16 + halo pad.
        xflat = x_nchw.reshape(B, C, HW).astype(jnp.bfloat16)
        xp = jnp.pad(xflat, ((0, 0), (0, 0), (Wpad, Wpad)))

        # Column-validity masks for the dx = -1 / +1 taps.
        col = jnp.arange(HW, dtype=jnp.int32) % W
        mask = jnp.stack([col >= 1, col <= W - 2]).astype(jnp.bfloat16)  # (2, HW)

        # Hoisted time bias: one tiny XLA matmul for the whole batch.
        tb = (te.astype(jnp.float32) @ self.wt + self.bt + self.b1)[:, :, None]  # (B,Hd,1)

        out = _fused_forward(xp, mask, tb, self.w1_b, self.w2_b, self.b2,
                             H=H, W=W, hidden=self.hidden, cout=C)  # (B, C, HW)
        return out.reshape(B, C, H, W)

    def forward(self, x, t_in):
        return self.model(x, self.t(t_in))

    # TODO(synk): p_x / sample_ode / sample are host-side sampling loops around
    # forward (RNG, Euler steps, clipping, image saving); not kernel hot paths.


# -----------------------------------------------------------------------------
# Pure-JAX reference (XLA convs) for a correctness check
# -----------------------------------------------------------------------------
def _reference_forward(rf, x, t_in):
    B, C, H, W = x.shape
    te = jnp.broadcast_to(t_in, (B, rf.embedding_size)).astype(jnp.float32)
    tb = te @ rf.wt + rf.bt + rf.b1                                   # (B, hidden)
    xq = (x.reshape(B, C, H * W).astype(jnp.bfloat16)
          .astype(jnp.float32).reshape(B, C, H, W))
    w1 = rf.w1_b.astype(jnp.float32).reshape(3, 3, rf.hidden, C).transpose(2, 3, 0, 1)
    w2 = rf.w2_b.astype(jnp.float32).reshape(3, 3, C, rf.hidden).transpose(2, 3, 0, 1)
    dn = ('NCHW', 'OIHW', 'NCHW')
    h = lax.conv_general_dilated(xq, w1, (1, 1), ((1, 1), (1, 1)),
                                 dimension_numbers=dn,
                                 precision=lax.Precision.HIGHEST)
    h = h + tb[:, :, None, None]
    h = h * jax.nn.sigmoid(h)
    h = h.astype(jnp.bfloat16).astype(jnp.float32)
    out = lax.conv_general_dilated(h, w2, (1, 1), ((1, 1), (1, 1)),
                                   dimension_numbers=dn,
                                   precision=lax.Precision.HIGHEST)
    return out + rf.b2.reshape(1, C, 1, 1)


if __name__ == "__main__":
    B, C, H, W = 2, 4, 16, 16
    key = jax.random.PRNGKey(0)
    kx, kt = jax.random.split(key)
    x = jax.random.normal(kx, (B, C, H, W), dtype=jnp.float32)
    t_in = jax.random.uniform(kt, (B, 1), dtype=jnp.float32)

    rf = RectifiedFlow(img_size=H, in_channels=C, hidden=32, embedding_size=2)
    out = jax.block_until_ready(rf.forward(x, t_in))

    assert out.shape == (B, C, H, W), out.shape
    assert bool(jnp.all(jnp.isfinite(out)))

    ref = jax.block_until_ready(_reference_forward(rf, x, t_in))
    max_err = float(jnp.max(jnp.abs(out - ref)))
    assert max_err < 5e-2, f"max abs err {max_err}"
    print("KERNEL_OK")
</pallas_src>

<mosaic_0001>
module attributes {stable_mosaic.version = 11 : i64} {
  func.func @_fused_kernel(%arg0: i32, %arg1: memref<1x4x512xbf16, #tpu.memory_space<vmem>>, %arg2: memref<2x256xbf16, #tpu.memory_space<vmem>>, %arg3: memref<1x32x1xf32, #tpu.memory_space<vmem>>, %arg4: memref<9x32x4xbf16, #tpu.memory_space<vmem>>, %arg5: memref<9x4x32xbf16, #tpu.memory_space<vmem>>, %arg6: memref<4x1xf32, #tpu.memory_space<vmem>>, %arg7: memref<1x4x256xf32, #tpu.memory_space<vmem>>, %arg8: memref<32x512xbf16, #tpu.memory_space<vmem>>) attributes {dimension_semantics = [#tpu.dimension_semantics<parallel>], iteration_bounds = array<i64: 2>, scalar_prefetch = 0 : i64, scratch_operands = 1 : i64, tpu.core_type = #tpu.core_type<tc>, window_params = [{transform_indices = @transform_0, window_bounds = array<i64: 1, 4, 512>}, {pipeline_mode = #tpu.pipeline_mode<synchronous>, transform_indices = @transform_1, window_bounds = array<i64: 2, 256>}, {transform_indices = @transform_2, window_bounds = array<i64: 1, 32, 1>}, {pipeline_mode = #tpu.pipeline_mode<synchronous>, transform_indices = @transform_3, window_bounds = array<i64: 9, 32, 4>}, {pipeline_mode = #tpu.pipeline_mode<synchronous>, transform_indices = @transform_4, window_bounds = array<i64: 9, 4, 32>}, {pipeline_mode = #tpu.pipeline_mode<synchronous>, transform_indices = @transform_5, window_bounds = array<i64: 4, 1>}, {transform_indices = @transform_6, window_bounds = array<i64: 1, 4, 256>}]} {
    %c0 = arith.constant 0 : index
    %c0_0 = arith.constant 0 : index
    %0 = vector.load %arg2[%c0, %c0_0] : memref<2x256xbf16, #tpu.memory_space<vmem>>, vector<1x256xbf16>
    %c1 = arith.constant 1 : index
    %c0_1 = arith.constant 0 : index
    %1 = vector.load %arg2[%c1, %c0_1] : memref<2x256xbf16, #tpu.memory_space<vmem>>, vector<1x256xbf16>
    %cst = arith.constant 0.000000e+00 : f32
    %2 = vector.broadcast %cst : f32 to vector<32x256xf32>
    %c0_2 = arith.constant 0 : index
    %c0_3 = arith.constant 0 : index
    %c111 = arith.constant 111 : index
    %3 = vector.load %arg1[%c0_2, %c0_3, %c111] : memref<1x4x512xbf16, #tpu.memory_space<vmem>>, vector<1x4x256xbf16>
    %4 = vector.shape_cast %3 : vector<1x4x256xbf16> to vector<4x256xbf16>
    %5 = vector.broadcast %0 : vector<1x256xbf16> to vector<4x256xbf16>
    %6 = arith.mulf %4, %5 : vector<4x256xbf16>
    %c0_4 = arith.constant 0 : index
    %c0_5 = arith.constant 0 : index
    %c0_6 = arith.constant 0 : index
    %7 = vector.load %arg4[%c0_4, %c0_5, %c0_6] : memref<9x32x4xbf16, #tpu.memory_space<vmem>>, vector<1x32x4xbf16>
    %8 = vector.shape_cast %7 : vector<1x32x4xbf16> to vector<32x4xbf16>
    %cst_7 = arith.constant dense<0.000000e+00> : vector<32x256xf32>
    %9 = tpu.matmul %8, %6, %cst_7 {dimension_numbers = #tpu.dot_dimension_numbers<[1], [0], [0], [1], [0, 0, 1, 1], [], []>} : vector<32x4xbf16>, vector<4x256xbf16>, vector<32x256xf32> -> vector<32x256xf32>
    %10 = arith.addf %2, %9 : vector<32x256xf32>
    %c0_8 = arith.constant 0 : index
    %c0_9 = arith.constant 0 : index
    %c112 = arith.constant 112 : index
    %11 = vector.load %arg1[%c0_8, %c0_9, %c112] : memref<1x4x512xbf16, #tpu.memory_space<vmem>>, vector<1x4x256xbf16>
    %12 = vector.shape_cast %11 : vector<1x4x256xbf16> to vector<4x256xbf16>
    %c1_10 = arith.constant 1 : index
    %c0_11 = arith.constant 0 : index
    %c0_12 = arith.constant 0 : index
    %13 = vector.load %arg4[%c1_10, %c0_11, %c0_12] : memref<9x32x4xbf16, #tpu.memory_space<vmem>>, vector<1x32x4xbf16>
    %14 = vector.shape_cast %13 : vector<1x32x4xbf16> to vector<32x4xbf16>
    %cst_13 = arith.constant dense<0.000000e+00> : vector<32x256xf32>
    %15 = tpu.matmul %14, %12, %cst_13 {dimension_numbers = #tpu.dot_dimension_numbers<[1], [0], [0], [1], [0, 0, 1, 1], [], []>} : vector<32x4xbf16>, vector<4x256xbf16>, vector<32x256xf32> -> vector<32x256xf32>
    %16 = arith.addf %10, %15 : vector<32x256xf32>
    %c0_14 = arith.constant 0 : index
    %c0_15 = arith.constant 0 : index
    %c113 = arith.constant 113 : index
    %17 = vector.load %arg1[%c0_14, %c0_15, %c113] : memref<1x4x512xbf16, #tpu.memory_space<vmem>>, vector<1x4x256xbf16>
    %18 = vector.shape_cast %17 : vector<1x4x256xbf16> to vector<4x256xbf16>
    %19 = vector.broadcast %1 : vector<1x256xbf16> to vector<4x256xbf16>
    %20 = arith.mulf %18, %19 : vector<4x256xbf16>
    %c2 = arith.constant 2 : index
    %c0_16 = arith.constant 0 : index
    %c0_17 = arith.constant 0 : index
    %21 = vector.load %arg4[%c2, %c0_16, %c0_17] : memref<9x32x4xbf16, #tpu.memory_space<vmem>>, vector<1x32x4xbf16>
    %22 = vector.shape_cast %21 : vector<1x32x4xbf16> to vector<32x4xbf16>
    %cst_18 = arith.constant dense<0.000000e+00> : vector<32x256xf32>
    %23 = tpu.matmul %22, %20, %cst_18 {dimension_numbers = #tpu.dot_dimension_numbers<[1], [0], [0], [1], [0, 0, 1, 1], [], []>} : vector<32x4xbf16>, vector<4x256xbf16>, vector<32x256xf32> -> vector<32x256xf32>
    %24 = arith.addf %16, %23 : vector<32x256xf32>
    %c0_19 = arith.constant 0 : index
    %c0_20 = arith.constant 0 : index
    %c127 = arith.constant 127 : index
    %25 = vector.load %arg1[%c0_19, %c0_20, %c127] : memref<1x4x512xbf16, #tpu.memory_space<vmem>>, vector<1x4x256xbf16>
    %26 = vector.shape_cast %25 : vector<1x4x256xbf16> to vector<4x256xbf16>
    %27 = vector.broadcast %0 : vector<1x256xbf16> to vector<4x256xbf16>
    %28 = arith.mulf %26, %27 : vector<4x256xbf16>
    %c3 = arith.constant 3 : index
    %c0_21 = arith.constant 0 : index
    %c0_22 = arith.constant 0 : index
    %29 = vector.load %arg4[%c3, %c0_21, %c0_22] : memref<9x32x4xbf16, #tpu.memory_space<vmem>>, vector<1x32x4xbf16>
    %30 = vector.shape_cast %29 : vector<1x32x4xbf16> to vector<32x4xbf16>
    %cst_23 = arith.constant dense<0.000000e+00> : vector<32x256xf32>
    %31 = tpu.matmul %30, %28, %cst_23 {dimension_numbers = #tpu.dot_dimension_numbers<[1], [0], [0], [1], [0, 0, 1, 1], [], []>} : vector<32x4xbf16>, vector<4x256xbf16>, vector<32x256xf32> -> vector<32x256xf32>
    %32 = arith.addf %24, %31 : vector<32x256xf32>
    %c0_24 = arith.constant 0 : index
    %c0_25 = arith.constant 0 : index
    %c128 = arith.constant 128 : index
    %33 = vector.load %arg1[%c0_24, %c0_25, %c128] : memref<1x4x512xbf16, #tpu.memory_space<vmem>>, vector<1x4x256xbf16>
    %34 = vector.shape_cast %33 : vector<1x4x256xbf16> to vector<4x256xbf16>
    %c4 = arith.constant 4 : index
    %c0_26 = arith.constant 0 : index
    %c0_27 = arith.constant 0 : index
    %35 = vector.load %arg4[%c4, %c0_26, %c0_27] : memref<9x32x4xbf16, #tpu.memory_space<vmem>>, vector<1x32x4xbf16>
    %36 = vector.shape_cast %35 : vector<1x32x4xbf16> to vector<32x4xbf16>
    %cst_28 = arith.constant dense<0.000000e+00> : vector<32x256xf32>
    %37 = tpu.matmul %36, %34, %cst_28 {dimension_numbers = #tpu.dot_dimension_numbers<[1], [0], [0], [1], [0, 0, 1, 1], [], []>} : vector<32x4xbf16>, vector<4x256xbf16>, vector<32x256xf32> -> vector<32x256xf32>
    %38 = arith.addf %32, %37 : vector<32x256xf32>
    %c0_29 = arith.constant 0 : index
    %c0_30 = arith.constant 0 : index
    %c129 = arith.constant 129 : index
    %39 = vector.load %arg1[%c0_29, %c0_30, %c129] : memref<1x4x512xbf16, #tpu.memory_space<vmem>>, vector<1x4x256xbf16>
    %40 = vector.shape_cast %39 : vector<1x4x256xbf16> to vector<4x256xbf16>
    %41 = vector.broadcast %1 : vector<1x256xbf16> to vector<4x256xbf16>
    %42 = arith.mulf %40, %41 : vector<4x256xbf16>
    %c5 = arith.constant 5 : index
    %c0_31 = arith.constant 0 : index
    %c0_32 = arith.constant 0 : index
    %43 = vector.load %arg4[%c5, %c0_31, %c0_32] : memref<9x32x4xbf16, #tpu.memory_space<vmem>>, vector<1x32x4xbf16>
    %44 = vector.shape_cast %43 : vector<1x32x4xbf16> to vector<32x4xbf16>
    %cst_33 = arith.constant dense<0.000000e+00> : vector<32x256xf32>
    %45 = tpu.matmul %44, %42, %cst_33 {dimension_numbers = #tpu.dot_dimension_numbers<[1], [0], [0], [1], [0, 0, 1, 1], [], []>} : vector<32x4xbf16>, vector<4x256xbf16>, vector<32x256xf32> -> vector<32x256xf32>
    %46 = arith.addf %38, %45 : vector<32x256xf32>
    %c0_34 = arith.constant 0 : index
    %c0_35 = arith.constant 0 : index
    %c143 = arith.constant 143 : index
    %47 = vector.load %arg1[%c0_34, %c0_35, %c143] : memref<1x4x512xbf16, #tpu.memory_space<vmem>>, vector<1x4x256xbf16>
    %48 = vector.shape_cast %47 : vector<1x4x256xbf16> to vector<4x256xbf16>
    %49 = vector.broadcast %0 : vector<1x256xbf16> to vector<4x256xbf16>
    %50 = arith.mulf %48, %49 : vector<4x256xbf16>
    %c6 = arith.constant 6 : index
    %c0_36 = arith.constant 0 : index
    %c0_37 = arith.constant 0 : index
    %51 = vector.load %arg4[%c6, %c0_36, %c0_37] : memref<9x32x4xbf16, #tpu.memory_space<vmem>>, vector<1x32x4xbf16>
    %52 = vector.shape_cast %51 : vector<1x32x4xbf16> to vector<32x4xbf16>
    %cst_38 = arith.constant dense<0.000000e+00> : vector<32x256xf32>
    %53 = tpu.matmul %52, %50, %cst_38 {dimension_numbers = #tpu.dot_dimension_numbers<[1], [0], [0], [1], [0, 0, 1, 1], [], []>} : vector<32x4xbf16>, vector<4x256xbf16>, vector<32x256xf32> -> vector<32x256xf32>
    %54 = arith.addf %46, %53 : vector<32x256xf32>
    %c0_39 = arith.constant 0 : index
    %c0_40 = arith.constant 0 : index
    %c144 = arith.constant 144 : index
    %55 = vector.load %arg1[%c0_39, %c0_40, %c144] : memref<1x4x512xbf16, #tpu.memory_space<vmem>>, vector<1x4x256xbf16>
    %56 = vector.shape_cast %55 : vector<1x4x256xbf16> to vector<4x256xbf16>
    %c7 = arith.constant 7 : index
    %c0_41 = arith.constant 0 : index
    %c0_42 = arith.constant 0 : index
    %57 = vector.load %arg4[%c7, %c0_41, %c0_42] : memref<9x32x4xbf16, #tpu.memory_space<vmem>>, vector<1x32x4xbf16>
    %58 = vector.shape_cast %57 : vector<1x32x4xbf16> to vector<32x4xbf16>
    %cst_43 = arith.constant dense<0.000000e+00> : vector<32x256xf32>
    %59 = tpu.matmul %58, %56, %cst_43 {dimension_numbers = #tpu.dot_dimension_numbers<[1], [0], [0], [1], [0, 0, 1, 1], [], []>} : vector<32x4xbf16>, vector<4x256xbf16>, vector<32x256xf32> -> vector<32x256xf32>
    %60 = arith.addf %54, %59 : vector<32x256xf32>
    %c0_44 = arith.constant 0 : index
    %c0_45 = arith.constant 0 : index
    %c145 = arith.constant 145 : index
    %61 = vector.load %arg1[%c0_44, %c0_45, %c145] : memref<1x4x512xbf16, #tpu.memory_space<vmem>>, vector<1x4x256xbf16>
    %62 = vector.shape_cast %61 : vector<1x4x256xbf16> to vector<4x256xbf16>
    %63 = vector.broadcast %1 : vector<1x256xbf16> to vector<4x256xbf16>
    %64 = arith.mulf %62, %63 : vector<4x256xbf16>
    %c8 = arith.constant 8 : index
    %c0_46 = arith.constant 0 : index
    %c0_47 = arith.constant 0 : index
    %65 = vector.load %arg4[%c8, %c0_46, %c0_47] : memref<9x32x4xbf16, #tpu.memory_space<vmem>>, vector<1x32x4xbf16>
    %66 = vector.shape_cast %65 : vector<1x32x4xbf16> to vector<32x4xbf16>
    %cst_48 = arith.constant dense<0.000000e+00> : vector<32x256xf32>
    %67 = tpu.matmul %66, %64, %cst_48 {dimension_numbers = #tpu.dot_dimension_numbers<[1], [0], [0], [1], [0, 0, 1, 1], [], []>} : vector<32x4xbf16>, vector<4x256xbf16>, vector<32x256xf32> -> vector<32x256xf32>
    %68 = arith.addf %60, %67 : vector<32x256xf32>
    %c0_49 = arith.constant 0 : index
    %c0_50 = arith.constant 0 : index
    %c0_51 = arith.constant 0 : index
    %69 = vector.load %arg3[%c0_49, %c0_50, %c0_51] : memref<1x32x1xf32, #tpu.memory_space<vmem>>, vector<1x32x1xf32>
    %70 = vector.shape_cast %69 : vector<1x32x1xf32> to vector<32x1xf32>
    %71 = vector.broadcast %70 : vector<32x1xf32> to vector<32x256xf32>
    %72 = arith.addf %68, %71 : vector<32x256xf32>
    %73 = arith.negf %72 : vector<32x256xf32>
    %74 = math.exp %73 : vector<32x256xf32>
    %cst_52 = arith.constant 1.000000e+00 : f32
    %75 = vector.broadcast %cst_52 : f32 to vector<32x256xf32>
    %76 = arith.addf %75, %74 : vector<32x256xf32>
    %77 = arith.divf %75, %76 : vector<32x256xf32>
    %78 = arith.mulf %72, %77 : vector<32x256xf32>
    %cst_53 = arith.constant 0.000000e+00 : bf16
    %79 = vector.broadcast %cst_53 : bf16 to vector<32x128xbf16>
    %c0_54 = arith.constant 0 : index
    %c0_55 = arith.constant 0 : index
    %80 = vector.load %arg8[%c0_54, %c0_55] : memref<32x512xbf16, #tpu.memory_space<vmem>>, vector<32x128xbf16>
    tpu.vector_store %arg8[%c0_54, %c0_55], %79 {strides = array<i32>} : memref<32x512xbf16, #tpu.memory_space<vmem>>, vector<32x128xbf16>,
    %c0_56 = arith.constant 0 : index
    %c384 = arith.constant 384 : index
    %81 = vector.load %arg8[%c0_56, %c384] : memref<32x512xbf16, #tpu.memory_space<vmem>>, vector<32x128xbf16>
    tpu.vector_store %arg8[%c0_56, %c384], %79 {strides = array<i32>} : memref<32x512xbf16, #tpu.memory_space<vmem>>, vector<32x128xbf16>,
    %82 = arith.truncf %78 : vector<32x256xf32> to vector<32x256xbf16>
    %c0_57 = arith.constant 0 : index
    %c128_58 = arith.constant 128 : index
    %83 = vector.load %arg8[%c0_57, %c128_58] : memref<32x512xbf16, #tpu.memory_space<vmem>>, vector<32x256xbf16>
    tpu.vector_store %arg8[%c0_57, %c128_58], %82 {strides = array<i32>} : memref<32x512xbf16, #tpu.memory_space<vmem>>, vector<32x256xbf16>,
    %cst_59 = arith.constant 0.000000e+00 : f32
    %84 = vector.broadcast %cst_59 : f32 to vector<4x256xf32>
    %c0_60 = arith.constant 0 : index
    %c111_61 = arith.constant 111 : index
    %85 = vector.load %arg8[%c0_60, %c111_61] : memref<32x512xbf16, #tpu.memory_space<vmem>>, vector<32x256xbf16>
    %86 = vector.broadcast %0 : vector<1x256xbf16> to vector<32x256xbf16>
    %87 = arith.mulf %85, %86 : vector<32x256xbf16>
    %c0_62 = arith.constant 0 : index
    %c0_63 = arith.constant 0 : index
    %c0_64 = arith.constant 0 : index
    %88 = vector.load %arg5[%c0_62, %c0_63, %c0_64] : memref<9x4x32xbf16, #tpu.memory_space<vmem>>, vector<1x4x32xbf16>
    %89 = vector.shape_cast %88 : vector<1x4x32xbf16> to vector<4x32xbf16>
    %cst_65 = arith.constant dense<0.000000e+00> : vector<4x256xf32>
    %90 = tpu.matmul %89, %87, %cst_65 {dimension_numbers = #tpu.dot_dimension_numbers<[1], [0], [0], [1], [0, 0, 1, 1], [], []>} : vector<4x32xbf16>, vector<32x256xbf16>, vector<4x256xf32> -> vector<4x256xf32>
    %91 = arith.addf %84, %90 : vector<4x256xf32>
    %c0_66 = arith.constant 0 : index
    %c112_67 = arith.constant 112 : index
    %92 = vector.load %arg8[%c0_66, %c112_67] : memref<32x512xbf16, #tpu.memory_space<vmem>>, vector<32x256xbf16>
    %c1_68 = arith.constant 1 : index
    %c0_69 = arith.constant 0 : index
    %c0_70 = arith.constant 0 : index
    %93 = vector.load %arg5[%c1_68, %c0_69, %c0_70] : memref<9x4x32xbf16, #tpu.memory_space<vmem>>, vector<1x4x32xbf16>
    %94 = vector.shape_cast %93 : vector<1x4x32xbf16> to vector<4x32xbf16>
    %cst_71 = arith.constant dense<0.000000e+00> : vector<4x256xf32>
    %95 = tpu.matmul %94, %92, %cst_71 {dimension_numbers = #tpu.dot_dimension_numbers<[1], [0], [0], [1], [0, 0, 1, 1], [], []>} : vector<4x32xbf16>, vector<32x256xbf16>, vector<4x256xf32> -> vector<4x256xf32>
    %96 = arith.addf %91, %95 : vector<4x256xf32>
    %c0_72 = arith.constant 0 : index
    %c113_73 = arith.constant 113 : index
    %97 = vector.load %arg8[%c0_72, %c113_73] : memref<32x512xbf16, #tpu.memory_space<vmem>>, vector<32x256xbf16>
    %98 = vector.broadcast %1 : vector<1x256xbf16> to vector<32x256xbf16>
    %99 = arith.mulf %97, %98 : vector<32x256xbf16>
    %c2_74 = arith.constant 2 : index
    %c0_75 = arith.constant 0 : index
    %c0_76 = arith.constant 0 : index
    %100 = vector.load %arg5[%c2_74, %c0_75, %c0_76] : memref<9x4x32xbf16, #tpu.memory_space<vmem>>, vector<1x4x32xbf16>
    %101 = vector.shape_cast %100 : vector<1x4x32xbf16> to vector<4x32xbf16>
    %cst_77 = arith.constant dense<0.000000e+00> : vector<4x256xf32>
    %102 = tpu.matmul %101, %99, %cst_77 {dimension_numbers = #tpu.dot_dimension_numbers<[1], [0], [0], [1], [0, 0, 1, 1], [], []>} : vector<4x32xbf16>, vector<32x256xbf16>, vector<4x256xf32> -> vector<4x256xf32>
    %103 = arith.addf %96, %102 : vector<4x256xf32>
    %c0_78 = arith.constant 0 : index
    %c127_79 = arith.constant 127 : index
    %104 = vector.load %arg8[%c0_78, %c127_79] : memref<32x512xbf16, #tpu.memory_space<vmem>>, vector<32x256xbf16>
    %105 = vector.broadcast %0 : vector<1x256xbf16> to vector<32x256xbf16>
    %106 = arith.mulf %104, %105 : vector<32x256xbf16>
    %c3_80 = arith.constant 3 : index
    %c0_81 = arith.constant 0 : index
    %c0_82 = arith.constant 0 : index
    %107 = vector.load %arg5[%c3_80, %c0_81, %c0_82] : memref<9x4x32xbf16, #tpu.memory_space<vmem>>, vector<1x4x32xbf16>
    %108 = vector.shape_cast %107 : vector<1x4x32xbf16> to vector<4x32xbf16>
    %cst_83 = arith.constant dense<0.000000e+00> : vector<4x256xf32>
    %109 = tpu.matmul %108, %106, %cst_83 {dimension_numbers = #tpu.dot_dimension_numbers<[1], [0], [0], [1], [0, 0, 1, 1], [], []>} : vector<4x32xbf16>, vector<32x256xbf16>, vector<4x256xf32> -> vector<4x256xf32>
    %110 = arith.addf %103, %109 : vector<4x256xf32>
    %c0_84 = arith.constant 0 : index
    %c128_85 = arith.constant 128 : index
    %111 = vector.load %arg8[%c0_84, %c128_85] : memref<32x512xbf16, #tpu.memory_space<vmem>>, vector<32x256xbf16>
    %c4_86 = arith.constant 4 : index
    %c0_87 = arith.constant 0 : index
    %c0_88 = arith.constant 0 : index
    %112 = vector.load %arg5[%c4_86, %c0_87, %c0_88] : memref<9x4x32xbf16, #tpu.memory_space<vmem>>, vector<1x4x32xbf16>
    %113 = vector.shape_cast %112 : vector<1x4x32xbf16> to vector<4x32xbf16>
    %cst_89 = arith.constant dense<0.000000e+00> : vector<4x256xf32>
    %114 = tpu.matmul %113, %111, %cst_89 {dimension_numbers = #tpu.dot_dimension_numbers<[1], [0], [0], [1], [0, 0, 1, 1], [], []>} : vector<4x32xbf16>, vector<32x256xbf16>, vector<4x256xf32> -> vector<4x256xf32>
    %115 = arith.addf %110, %114 : vector<4x256xf32>
    %c0_90 = arith.constant 0 : index
    %c129_91 = arith.constant 129 : index
    %116 = vector.load %arg8[%c0_90, %c129_91] : memref<32x512xbf16, #tpu.memory_space<vmem>>, vector<32x256xbf16>
    %117 = vector.broadcast %1 : vector<1x256xbf16> to vector<32x256xbf16>
    %118 = arith.mulf %116, %117 : vector<32x256xbf16>
    %c5_92 = arith.constant 5 : index
    %c0_93 = arith.constant 0 : index
    %c0_94 = arith.constant 0 : index
    %119 = vector.load %arg5[%c5_92, %c0_93, %c0_94] : memref<9x4x32xbf16, #tpu.memory_space<vmem>>, vector<1x4x32xbf16>
    %120 = vector.shape_cast %119 : vector<1x4x32xbf16> to vector<4x32xbf16>
    %cst_95 = arith.constant dense<0.000000e+00> : vector<4x256xf32>
    %121 = tpu.matmul %120, %118, %cst_95 {dimension_numbers = #tpu.dot_dimension_numbers<[1], [0], [0], [1], [0, 0, 1, 1], [], []>} : vector<4x32xbf16>, vector<32x256xbf16>, vector<4x256xf32> -> vector<4x256xf32>
    %122 = arith.addf %115, %121 : vector<4x256xf32>
    %c0_96 = arith.constant 0 : index
    %c143_97 = arith.constant 143 : index
    %123 = vector.load %arg8[%c0_96, %c143_97] : memref<32x512xbf16, #tpu.memory_space<vmem>>, vector<32x256xbf16>
    %124 = vector.broadcast %0 : vector<1x256xbf16> to vector<32x256xbf16>
    %125 = arith.mulf %123, %124 : vector<32x256xbf16>
    %c6_98 = arith.constant 6 : index
    %c0_99 = arith.constant 0 : index
    %c0_100 = arith.constant 0 : index
    %126 = vector.load %arg5[%c6_98, %c0_99, %c0_100] : memref<9x4x32xbf16, #tpu.memory_space<vmem>>, vector<1x4x32xbf16>
    %127 = vector.shape_cast %126 : vector<1x4x32xbf16> to vector<4x32xbf16>
    %cst_101 = arith.constant dense<0.000000e+00> : vector<4x256xf32>
    %128 = tpu.matmul %127, %125, %cst_101 {dimension_numbers = #tpu.dot_dimension_numbers<[1], [0], [0], [1], [0, 0, 1, 1], [], []>} : vector<4x32xbf16>, vector<32x256xbf16>, vector<4x256xf32> -> vector<4x256xf32>
    %129 = arith.addf %122, %128 : vector<4x256xf32>
    %c0_102 = arith.constant 0 : index
    %c144_103 = arith.constant 144 : index
    %130 = vector.load %arg8[%c0_102, %c144_103] : memref<32x512xbf16, #tpu.memory_space<vmem>>, vector<32x256xbf16>
    %c7_104 = arith.constant 7 : index
    %c0_105 = arith.constant 0 : index
    %c0_106 = arith.constant 0 : index
    %131 = vector.load %arg5[%c7_104, %c0_105, %c0_106] : memref<9x4x32xbf16, #tpu.memory_space<vmem>>, vector<1x4x32xbf16>
    %132 = vector.shape_cast %131 : vector<1x4x32xbf16> to vector<4x32xbf16>
    %cst_107 = arith.constant dense<0.000000e+00> : vector<4x256xf32>
    %133 = tpu.matmul %132, %130, %cst_107 {dimension_numbers = #tpu.dot_dimension_numbers<[1], [0], [0], [1], [0, 0, 1, 1], [], []>} : vector<4x32xbf16>, vector<32x256xbf16>, vector<4x256xf32> -> vector<4x256xf32>
    %134 = arith.addf %129, %133 : vector<4x256xf32>
    %c0_108 = arith.constant 0 : index
    %c145_109 = arith.constant 145 : index
    %135 = vector.load %arg8[%c0_108, %c145_109] : memref<32x512xbf16, #tpu.memory_space<vmem>>, vector<32x256xbf16>
    %136 = vector.broadcast %1 : vector<1x256xbf16> to vector<32x256xbf16>
    %137 = arith.mulf %135, %136 : vector<32x256xbf16>
    %c8_110 = arith.constant 8 : index
    %c0_111 = arith.constant 0 : index
    %c0_112 = arith.constant 0 : index
    %138 = vector.load %arg5[%c8_110, %c0_111, %c0_112] : memref<9x4x32xbf16, #tpu.memory_space<vmem>>, vector<1x4x32xbf16>
    %139 = vector.shape_cast %138 : vector<1x4x32xbf16> to vector<4x32xbf16>
    %cst_113 = arith.constant dense<0.000000e+00> : vector<4x256xf32>
    %140 = tpu.matmul %139, %137, %cst_113 {dimension_numbers = #tpu.dot_dimension_numbers<[1], [0], [0], [1], [0, 0, 1, 1], [], []>} : vector<4x32xbf16>, vector<32x256xbf16>, vector<4x256xf32> -> vector<4x256xf32>
    %141 = arith.addf %134, %140 : vector<4x256xf32>
    %c0_114 = arith.constant 0 : index
    %c0_115 = arith.constant 0 : index
    %142 = vector.load %arg6[%c0_114, %c0_115] : memref<4x1xf32, #tpu.memory_space<vmem>>, vector<4x1xf32>
    %143 = vector.broadcast %142 : vector<4x1xf32> to vector<4x256xf32>
    %144 = arith.addf %141, %143 : vector<4x256xf32>
    %c0_116 = arith.constant 0 : index
    %c0_117 = arith.constant 0 : index
    %c0_118 = arith.constant 0 : index
    %145 = vector.load %arg7[%c0_116, %c0_117, %c0_118] : memref<1x4x256xf32, #tpu.memory_space<vmem>>, vector<1x4x256xf32>
    %146 = vector.shape_cast %145 : vector<1x4x256xf32> to vector<4x256xf32>
    %147 = vector.shape_cast %144 : vector<4x256xf32> to vector<1x4x256xf32>
    tpu.vector_store %arg7[%c0_116, %c0_117, %c0_118], %147 {strides = array<i32>} : memref<1x4x256xf32, #tpu.memory_space<vmem>>, vector<1x4x256xf32>,
    return
  }
  func.func @transform_0(%arg0: i32) -> (i32, i32, i32) {
    %c0_i32 = arith.constant 0 : i32
    %c0_i32_0 = arith.constant 0 : i32
    %c0_i32_1 = arith.constant 0 : i32
    return %arg0, %c0_i32, %c0_i32_0 : i32, i32, i32
  }
  func.func @transform_1(%arg0: i32) -> (i32, i32) {
    %c0_i32 = arith.constant 0 : i32
    %c0_i32_0 = arith.constant 0 : i32
    %c0_i32_1 = arith.constant 0 : i32
    return %c0_i32, %c0_i32_0 : i32, i32
  }
  func.func @transform_2(%arg0: i32) -> (i32, i32, i32) {
    %c0_i32 = arith.constant 0 : i32
    %c0_i32_0 = arith.constant 0 : i32
    %c0_i32_1 = arith.constant 0 : i32
    return %arg0, %c0_i32, %c0_i32_0 : i32, i32, i32
  }
  func.func @transform_3(%arg0: i32) -> (i32, i32, i32) {
    %c0_i32 = arith.constant 0 : i32
    %c0_i32_0 = arith.constant 0 : i32
    %c0_i32_1 = arith.constant 0 : i32
    %c0_i32_2 = arith.constant 0 : i32
    return %c0_i32, %c0_i32_0, %c0_i32_1 : i32, i32, i32
  }
  func.func @transform_4(%arg0: i32) -> (i32, i32, i32) {
    %c0_i32 = arith.constant 0 : i32
    %c0_i32_0 = arith.constant 0 : i32
    %c0_i32_1 = arith.constant 0 : i32
    %c0_i32_2 = arith.constant 0 : i32
    return %c0_i32, %c0_i32_0, %c0_i32_1 : i32, i32, i32
  }
  func.func @transform_5(%arg0: i32) -> (i32, i32) {
    %c0_i32 = arith.constant 0 : i32
    %c0_i32_0 = arith.constant 0 : i32
    %c0_i32_1 = arith.constant 0 : i32
    return %c0_i32, %c0_i32_0 : i32, i32
  }
  func.func @transform_6(%arg0: i32) -> (i32, i32, i32) {
    %c0_i32 = arith.constant 0 : i32
    %c0_i32_0 = arith.constant 0 : i32
    %c0_i32_1 = arith.constant 0 : i32
    return %arg0, %c0_i32, %c0_i32_0 : i32, i32, i32
  }
}

</mosaic_0001>

<llo_original>
// kernel: tpu_custom_call.1
$region0: #{tpu_custom_call.1}
  #allocation0 [shape = 'u32[]', space=smem, size = 0x4, offset = 0x4, fixed_abs, tag = 'smem constant byte address 0x4 - core index']
  #allocation1 [shape = 'u32[144,128]{1,0:T(1,128)}', space=vmem, size = 0x12000, scoped, tag = 'internal scratch']
  #allocation2 [shape = 'bf16[32,512]{1,0:T(8,128)(2,1)}', space=vmem, size = 0x8000, scoped, tag = 'scratch operand']
  %s0 = inlined_call_operand.vmem [shape: bf16[2,4,512], index: 0, kind: input, shape index: {}]
  %s1 = inlined_call_operand.vmem [shape: bf16[2,256], index: 1, kind: input, shape index: {}]
  %s2 = inlined_call_operand.vmem [shape: f32[2,32,1], index: 2, kind: input, shape index: {}]
  %s3 = inlined_call_operand.vmem [shape: bf16[9,32,4], index: 3, kind: input, shape index: {}]
  %s4 = inlined_call_operand.vmem [shape: bf16[9,4,32], index: 4, kind: input, shape index: {}]
  %s5 = inlined_call_operand.vmem [shape: f32[4,1], index: 5, kind: input, shape index: {}]
  %s6 = inlined_call_operand.hbm [shape: f32[2,4,256], index: 6, kind: output, shape index: {}]
  %s7 = sld [smem:[#allocation0]]
  $region57: #{tpu_custom_call.1} parent=0
    _
  %s9 = ssub.s32 1, %s7
  %s10 = scalar_select 0, %s9, %s7
  $region1: #{tpu_custom_call.1} parent=0
    #allocation3 [shape = 'u8[8192]{0}', space=vmem, size = 0x2000, scoped, tag = 'output window, operand 0']
    #allocation4 [shape = 's32[2]{0}', space=sflag, size = 0x8, scoped, tag = 'scoped memory for tpu_custom_call.1']
    %11 = vsyncpa [#allocation4], 0
    %s12 = scalar_lea.sflag [#allocation4], 1
    %13 = vsyncpa %s12, 0
    loop: start=0, step=1, limit=4
    $region2: #{tpu_custom_call.1} parent=1 // loop_pre_header
      _
    $region3: #{tpu_custom_call.1} parent=1 // loop_header
      %s15 = sphi 0, %s19
      %p16 = scmp.ge.s32.totalorder %s15, 4
      %s25 = sphi 0, %s27
      %s28 = sphi 0, %s25
      %s29 = sphi 0, %s28
      %s45 = sphi 0, %s29
      %s49 = sphi 0, %s49
      %s51 = sphi 0, %s49
      %s52 = sphi 0, %s51
      %s66 = sphi 0, %s52
      %s72 = sphi 0, %s74
      %s75 = sphi 0, %s72
      %s76 = sphi 0, %s75
      %s92 = sphi 0, %s76
      %s96 = sphi 0, %s96
      %s98 = sphi 0, %s96
      %s99 = sphi 0, %s98
      %s113 = sphi 0, %s99
      %s117 = sphi 0, %s117
      %s119 = sphi 0, %s117
      %s120 = sphi 0, %s119
      %s134 = sphi 0, %s120
      %s138 = sphi 0, %s138
      %s140 = sphi 0, %s138
      %s141 = sphi 0, %s140
      %s155 = sphi 0, %s141
      %s161 = sphi 0, %s163
      %s164 = sphi 0, %s161
      %s165 = sphi 0, %s164
      %s181 = sphi 0, %s165
    $region4: #{tpu_custom_call.1} parent=1 // loop_header_branch
      %18 = sbr.rel (%p16) target = $region8
    $region5: #{tpu_custom_call.1} parent=1 // loop_body
      %s20 = ssub.s32 %s15, 1
      %s21 = ssub.s32 %s15, 2
      %s22 = sadd.s32 %s15, 1
      %s23 = ssub.s32 %s15, %s22
      %p24 = scmp.eq.s32.totalorder %s23, 0
      %s26 = sadd.s32 %s25, 1
      %s27 = scalar_select %p24, %s25, %s26
      %p30 = pneg %p24
      %p31 = scmp.eq.s32.totalorder %s15, 1
      %p32 = por %p30, %p31
      %p33 = scmp.ne.s32.totalorder %s25, %s28
      %p34 = scmp.eq.s32.totalorder %s15, 0
      %p35 = por %p33, %p34
      %p36 = scmp.ne.s32.totalorder %s25, %s28
      %p37 = scmp.eq.s32.totalorder %s20, 1
      %p38 = por %p36, %p37
      %p39 = scmp.ne.s32.totalorder %s28, %s29
      %p40 = scmp.eq.s32.totalorder %s20, 0
      %p41 = por %p39, %p40
      %p42 = scmp.ne.s32.totalorder %s28, %s29
      %p43 = scmp.eq.s32.totalorder %s21, 1
      %p44 = por %p42, %p43
      %p46 = scmp.ne.s32.totalorder %s29, %s45
      %p47 = scmp.eq.s32.totalorder %s21, 0
      %p48 = por %p46, %p47
      %s50 = sadd.s32 %s49, 1
      %p53 = scmp.eq.s32.totalorder %s15, 1
      %p54 = scmp.ne.s32.totalorder %s49, %s51
      %p55 = scmp.eq.s32.totalorder %s15, 0
      %p56 = por %p54, %p55
      %p57 = scmp.ne.s32.totalorder %s49, %s51
      %p58 = scmp.eq.s32.totalorder %s20, 1
      %p59 = por %p57, %p58
      %p60 = scmp.ne.s32.totalorder %s51, %s52
      %p61 = scmp.eq.s32.totalorder %s20, 0
      %p62 = por %p60, %p61
      %p63 = scmp.ne.s32.totalorder %s51, %s52
      %p64 = scmp.eq.s32.totalorder %s21, 1
      %p65 = por %p63, %p64
      %p67 = scmp.ne.s32.totalorder %s52, %s66
      %p68 = scmp.eq.s32.totalorder %s21, 0
      %p69 = por %p67, %p68
      %s70 = ssub.s32 %s15, %s22
      %p71 = scmp.eq.s32.totalorder %s70, 0
      %s73 = sadd.s32 %s72, 1
      %s74 = scalar_select %p71, %s72, %s73
      %p77 = pneg %p71
      %p78 = scmp.eq.s32.totalorder %s15, 1
      %p79 = por %p77, %p78
      %p80 = scmp.ne.s32.totalorder %s72, %s75
      %p81 = scmp.eq.s32.totalorder %s15, 0
      %p82 = por %p80, %p81
      %p83 = scmp.ne.s32.totalorder %s72, %s75
      %p84 = scmp.eq.s32.totalorder %s20, 1
      %p85 = por %p83, %p84
      %p86 = scmp.ne.s32.totalorder %s75, %s76
      %p87 = scmp.eq.s32.totalorder %s20, 0
      %p88 = por %p86, %p87
      %p89 = scmp.ne.s32.totalorder %s75, %s76
      %p90 = scmp.eq.s32.totalorder %s21, 1
      %p91 = por %p89, %p90
      %p93 = scmp.ne.s32.totalorder %s76, %s92
      %p94 = scmp.eq.s32.totalorder %s21, 0
      %p95 = por %p93, %p94
      %s97 = sadd.s32 %s96, 1
      %p100 = scmp.eq.s32.totalorder %s15, 1
      %p101 = scmp.ne.s32.totalorder %s96, %s98
      %p102 = scmp.eq.s32.totalorder %s15, 0
      %p103 = por %p101, %p102
      %p104 = scmp.ne.s32.totalorder %s96, %s98
      %p105 = scmp.eq.s32.totalorder %s20, 1
      %p106 = por %p104, %p105
      %p107 = scmp.ne.s32.totalorder %s98, %s99
      %p108 = scmp.eq.s32.totalorder %s20, 0
      %p109 = por %p107, %p108
      %p110 = scmp.ne.s32.totalorder %s98, %s99
      %p111 = scmp.eq.s32.totalorder %s21, 1
      %p112 = por %p110, %p111
      %p114 = scmp.ne.s32.totalorder %s99, %s113
      %p115 = scmp.eq.s32.totalorder %s21, 0
      %p116 = por %p114, %p115
      %s118 = sadd.s32 %s117, 1
      %p121 = scmp.eq.s32.totalorder %s15, 1
      %p122 = scmp.ne.s32.totalorder %s117, %s119
      %p123 = scmp.eq.s32.totalorder %s15, 0
      %p124 = por %p122, %p123
      %p125 = scmp.ne.s32.totalorder %s117, %s119
      %p126 = scmp.eq.s32.totalorder %s20, 1
      %p127 = por %p125, %p126
      %p128 = scmp.ne.s32.totalorder %s119, %s120
      %p129 = scmp.eq.s32.totalorder %s20, 0
      %p130 = por %p128, %p129
      %p131 = scmp.ne.s32.totalorder %s119, %s120
      %p132 = scmp.eq.s32.totalorder %s21, 1
      %p133 = por %p131, %p132
      %p135 = scmp.ne.s32.totalorder %s120, %s134
      %p136 = scmp.eq.s32.totalorder %s21, 0
      %p137 = por %p135, %p136
      %s139 = sadd.s32 %s138, 1
      %p142 = scmp.eq.s32.totalorder %s15, 1
      %p143 = scmp.ne.s32.totalorder %s138, %s140
      %p144 = scmp.eq.s32.totalorder %s15, 0
      %p145 = por %p143, %p144
      %p146 = scmp.ne.s32.totalorder %s138, %s140
      %p147 = scmp.eq.s32.totalorder %s20, 1
      %p148 = por %p146, %p147
      %p149 = scmp.ne.s32.totalorder %s140, %s141
      %p150 = scmp.eq.s32.totalorder %s20, 0
      %p151 = por %p149, %p150
      %p152 = scmp.ne.s32.totalorder %s140, %s141
      %p153 = scmp.eq.s32.totalorder %s21, 1
      %p154 = por %p152, %p153
      %p156 = scmp.ne.s32.totalorder %s141, %s155
      %p157 = scmp.eq.s32.totalorder %s21, 0
      %p158 = por %p156, %p157
      %s159 = ssub.s32 %s15, %s22
      %p160 = scmp.eq.s32.totalorder %s159, 0
      %s162 = sadd.s32 %s161, 1
      %s163 = scalar_select %p160, %s161, %s162
      %p166 = pneg %p160
      %p167 = scmp.eq.s32.totalorder %s15, 1
      %p168 = por %p166, %p167
      %p169 = scmp.ne.s32.totalorder %s161, %s164
      %p170 = scmp.eq.s32.totalorder %s15, 0
      %p171 = por %p169, %p170
      %p172 = scmp.ne.s32.totalorder %s161, %s164
      %p173 = scmp.eq.s32.totalorder %s20, 1
      %p174 = por %p172, %p173
      %p175 = scmp.ne.s32.totalorder %s164, %s165
      %p176 = scmp.eq.s32.totalorder %s20, 0
      %p177 = por %p175, %p176
      %p178 = scmp.ne.s32.totalorder %s164, %s165
      %p179 = scmp.eq.s32.totalorder %s21, 1
      %p180 = por %p178, %p179
      %p182 = scmp.ne.s32.totalorder %s165, %s181
      %p183 = scmp.eq.s32.totalorder %s21, 0
      %p184 = por %p182, %p183
      %p185 = scmp.le.s32.totalorder 1, %s15
      %p186 = scmp.lt.s32.totalorder %s15, 3
      %p187 = pnand %p185, %p186
      %p188 = pneg %p187
      // Predicated region
      $region9: #{tpu_custom_call.1} parent=5 // pred_check
        _
      $region10: #{tpu_custom_call.1} parent=5 // pred_check_branch
        %190 = sbr.rel (%p187) target = $region12
      $region11: #{tpu_custom_call.1} parent=5 // pred_region
        %s191 = ssub.s32 %s15, 1
        // Predicated region
        $region13: #{tpu_custom_call.1} parent=11 // pred_check
          %p192 = pneg %p62
        $region14: #{tpu_custom_call.1} parent=11 // pred_check_branch
          %194 = sbr.rel (%p192) target = $region16
        $region15: #{tpu_custom_call.1} parent=11 // pred_region
          _
        $region16: #{tpu_custom_call.1} parent=11 // pred_fallthru
          _
        // Predicated region
        $region17: #{tpu_custom_call.1} parent=11 // pred_check
          %p195 = pneg %p109
        $region18: #{tpu_custom_call.1} parent=11 // pred_check_branch
          %197 = sbr.rel (%p195) target = $region20
        $region19: #{tpu_custom_call.1} parent=11 // pred_region
          _
        $region20: #{tpu_custom_call.1} parent=11 // pred_fallthru
          _
        // Predicated region
        $region21: #{tpu_custom_call.1} parent=11 // pred_check
          %p198 = pneg %p130
        $region22: #{tpu_custom_call.1} parent=11 // pred_check_branch
          %200 = sbr.rel (%p198) target = $region24
        $region23: #{tpu_custom_call.1} parent=11 // pred_region
          _
        $region24: #{tpu_custom_call.1} parent=11 // pred_fallthru
          _
        // Predicated region
        $region25: #{tpu_custom_call.1} parent=11 // pred_check
          %p201 = pneg %p151
        $region26: #{tpu_custom_call.1} parent=11 // pred_check_branch
          %203 = sbr.rel (%p201) target = $region28
        $region27: #{tpu_custom_call.1} parent=11 // pred_region
          _
        $region28: #{tpu_custom_call.1} parent=11 // pred_fallthru
          _
      $region12: #{tpu_custom_call.1} parent=5 // pred_fallthru
        _
      %p204 = scmp.lt.s32.totalorder %s15, 2
      // Predicated region
      $region29: #{tpu_custom_call.1} parent=5 // pred_check
        %p205 = pneg %p204
      $region30: #{tpu_custom_call.1} parent=5 // pred_check_branch
        %207 = sbr.rel (%p205) target = $region32
      $region31: #{tpu_custom_call.1} parent=5 // pred_region
        // Predicated region
        $region33: #{tpu_custom_call.1} parent=31 // pred_check
          %p208 = pneg %p35
        $region34: #{tpu_custom_call.1} parent=31 // pred_check_branch
          %210 = sbr.rel (%p208) target = $region36
        $region35: #{tpu_custom_call.1} parent=31 // pred_region
          %p211 = scmp.lt.s32.totalorder %s15, 1
          %s212 = scalar_select %p211, %s15, 1
          %s213 = smul.addr %s212, 4
          %s214 = smul.addr %s213, 2
          %s215 = scalar_lea.vmem %s0, %s214
        $region36: #{tpu_custom_call.1} parent=31 // pred_fallthru
          _
        // Predicated region
        $region37: #{tpu_custom_call.1} parent=31 // pred_check
          %p216 = pneg %p82
        $region38: #{tpu_custom_call.1} parent=31 // pred_check_branch
          %218 = sbr.rel (%p216) target = $region40
        $region39: #{tpu_custom_call.1} parent=31 // pred_region
          %p219 = scmp.lt.s32.totalorder %s15, 1
          %s220 = scalar_select %p219, %s15, 1
          %s221 = smul.addr %s220, 4
          %s222 = smul.addr %s221, 8
          %s223 = scalar_lea.vmem %s2, %s222
        $region40: #{tpu_custom_call.1} parent=31 // pred_fallthru
          _
      $region32: #{tpu_custom_call.1} parent=5 // pred_fallthru
        _
      %p224 = scmp.le.s32.totalorder 1, %s15
      %p225 = scmp.lt.s32.totalorder %s15, 3
      %p226 = pnand %p224, %p225
      %p227 = pneg %p226
      // Predicated region
      $region41: #{tpu_custom_call.1} parent=5 // pred_check
        _
      $region42: #{tpu_custom_call.1} parent=5 // pred_check_branch
        %229 = sbr.rel (%p226) target = $region44
      $region43: #{tpu_custom_call.1} parent=5 // pred_region
        %s230 = ssub.s32 %s15, 1
        %p231 = scmp.lt.s32.totalorder %s20, 1
        %s232 = scalar_select %p231, %s20, 1
        %s233 = smul.addr %s232, 4
        %s234 = smul.addr %s233, 2
        %s235 = scalar_lea.vmem %s0, %s234
        %p236 = pneg %p41
        %p237 = pneg %p38
        %p238 = pneg %p62
        %p239 = pneg %p59
        %p240 = scmp.lt.s32.totalorder %s20, 1
        %s241 = scalar_select %p240, %s20, 1
        %s242 = smul.addr %s241, 4
        %s243 = smul.addr %s242, 8
        %s244 = scalar_lea.vmem %s2, %s243
        %p245 = pneg %p88
        %p246 = pneg %p85
        %p247 = pneg %p109
        %p248 = pneg %p106
        %p249 = pneg %p130
        %p250 = pneg %p127
        %p251 = pneg %p151
        %p252 = pneg %p148
        %p253 = pneg %p177
        %p254 = pneg %p174
        %s255 = sand.u32 %s164, 1
        %s256 = scalar_lea.sflag [#allocation4], %s255
        %s257 = sand.u32 %s164, 1
        %s258 = smul.addr %s257, 8
        %s259 = scalar_lea.vmem [#allocation3], %s258
        %p260 = scmp.lt.s32.totalorder %s20, 1
        %s261 = scalar_select %p260, %s20, 1
        %s262 = smul.addr %s261, 4
        %s263 = smul.addr %s262, 2
        %s264 = scalar_lea.vmem %s0, %s263
        %p265 = scmp.lt.s32.totalorder %s20, 1
        %s266 = scalar_select %p265, %s20, 1
        %s267 = smul.addr %s266, 4
        %s268 = smul.addr %s267, 8
        %s269 = scalar_lea.vmem %s2, %s268
        %v271 = vld [vmem:[%s1] sm:$0x3]
        %v272 = vld [vmem:[%s264] sm:$0x3f]
        %v275 = vunpack.c.l.s4 1966171168
        %v276 = vunpack.c.0.s8 %v275
        %v277 = vlaneseq
        %v278 = vshrl.u32 %v277, 7
        %v279 = vsub.s32 %v276, %v278
        %v280 = vrot.slane %v271, %v279
        %v281 = vcombine.high %v280, %v280
        %v283 = vunpack.c.l.s4 1966171168
        %v284 = vunpack.c.0.s8 %v283
        %v285 = vlaneseq
        %v286 = vshrl.u32 %v285, 7
        %v287 = vsub.s32 %v284, %v286
        %v288 = vrot.slane %v280, %v287
        %v290 = vunpack.c.l.s4 1966171168
        %v291 = vunpack.c.0.s8 %v290
        %v292 = vlaneseq
        %v293 = vshrl.u32 %v292, 7
        %v294 = vsub.s32 %v291, %v293
        %v295 = vrot.slane %v281, %v294
        %v297 = vpack.i.b16 %v288, %v288
        %v299 = vlaneseq
        %v300 = vshrl.u32 %v299, 7
        %v301 = vsub.s32 0, %v300
        %v302 = vrot.slane %v297, %v301
        %v304 = vpack.i.b16 %v295, %v295
        %v306 = vlaneseq
        %v307 = vshrl.u32 %v306, 7
        %v308 = vsub.s32 0, %v307
        %v309 = vrot.slane %v304, %v308
        %v312 = vcombine.low %v302, %v309
        %v314 = vunpack.c.l.s4 1983009808
        %v315 = vunpack.c.0.s8 %v314
        %v316 = vlaneseq
        %v317 = vshrl.u32 %v316, 7
        %v318 = vsub.s32 %v315, %v317
        %v319 = vrot.slane %v312, %v318
        %320 = vrot.lane.b32.xlu0 %v319, 111
        %v321 = vpop.permute.xlu0 %320
        %v322 = vrot.slane %v321, 6
        %vm323 = vcmask 908288
        %v324 = vsel %vm323, %v322, %v321
        %v326 = vmul.bf16 %v272, %v324
        %v327 = vld [vmem:[%s3] sm:$0xf]
        %v328 = vld [vmem:[%s3 + $0x4] sm:$0xf]
        %v329 = vld [vmem:[%s3 + $0x8] sm:$0xf]
        %v330 = vld [vmem:[%s3 + $0xc] sm:$0xf]
        %s331 = scalar_lea.vmem %s3, 16
        %v332 = vld [vmem:[%s331] sm:$0xf]
        %v333 = vld [vmem:[%s331 + $0x4] sm:$0xf]
        %v334 = vld [vmem:[%s331 + $0x8] sm:$0xf]
        %v335 = vld [vmem:[%s331 + $0xc] sm:$0xf]
        %v340 = vunpack.c.l.b16 %v332
        %v341 = vunpack.c.l.b16 %v333
        %v342 = vunpack.c.l.b16 %v334
        %v343 = vunpack.c.l.b16 %v335
        %v344 = vpack.c.b16 %v341, %v340
        %v345 = vpack.c.b16 %v343, %v342
        %v347 = vcombine.high %v272, %v272
        %v349 = vunpack.c.l.s4 1983009808
        %v350 = vunpack.c.0.s8 %v349
        %v351 = vlaneseq
        %v352 = vshrl.u32 %v351, 7
        %v353 = vsub.s32 %v350, %v352
        %v354 = vrot.slane %v272, %v353
        %v356 = vunpack.c.l.s4 1983009808
        %v357 = vunpack.c.0.s8 %v356
        %v358 = vlaneseq
        %v359 = vshrl.u32 %v358, 7
        %v360 = vsub.s32 %v357, %v359
        %v361 = vrot.slane %v347, %v360
        %v362 = vcombine.high %v354, %v354
        %363 = vrot.lane.b32.xlu0 %v354, 16
        %v364 = vpop.permute.xlu0 %363
        %365 = vrot.lane.b32.xlu0 %v362, 16
        %v366 = vpop.permute.xlu0 %365
        %367 = vrot.lane.b32.xlu0 %v361, 16
        %v368 = vpop.permute.xlu0 %367
        %vm369 = vcmask 130048
        %v370 = vsel %vm369, %v364, %v366
        %v371 = vsel %vm369, %v366, %v368
        %vm372 = vcmask 31744
        %v374 = vsel %vm372, %v344, 0
        %v377 = vsel %vm372, %v345, 0
        %vm379 = vcmask 1041408
        %v381 = vsel %vm379, %v370, 0
        %v384 = vsel %vm379, %v371, 0
        %386 = vmatprep.subr.bf16.mxu0 0
        %387 = vmatpush1.bf16.msra.mxu0 0
        %388 = vmatprep.subr.bf16.mxu0 0
        %389 = vmatpush1.bf16.msra.mxu0 0
        %390 = vmatprep.subr.bf16.mxu0 0
        %391 = vmatpush1.bf16.msra.mxu0 0
        %392 = vmatprep.subr.bf16.mxu0 0
        %393 = vmatpush1.bf16.msra.mxu0 0
        %394 = vmatprep.subr.bf16.mxu0 0
        %395 = vmatpush1.bf16.msra.mxu0 0
        %396 = vmatprep.subr.bf16.mxu0 0
        %397 = vmatpush1.bf16.msra.mxu0 0
        %398 = vmatprep.subr.bf16.mxu0 0
        %399 = vmatpush1.bf16.msra.mxu0 0
        %400 = vmatprep.subr.bf16.mxu0 %v384
        %401 = vmatpush1.bf16.msra.mxu0 %v381
        %402 = vmatprep.subr.bf16.mxu0 0
        %403 = vmatpush2.bf16.msra.mxu0 0
        %404 = vmatprep.subr.bf16.mxu0 0
        %405 = vmatpush2.bf16.msra.mxu0 0
        %406 = vmatprep.subr.bf16.mxu0 0
        %407 = vmatpush2.bf16.msra.mxu0 0
        %408 = vmatprep.subr.bf16.mxu0 0
        %409 = vmatpush2.bf16.msra.mxu0 0
        %410 = vmatprep.subr.bf16.mxu0 0
        %411 = vmatpush2.bf16.msra.mxu0 0
        %412 = vmatprep.subr.bf16.mxu0 0
        %413 = vmatpush2.bf16.msra.mxu0 0
        %414 = vmatprep.subr.bf16.mxu0 0
        %415 = vmatpush2.bf16.msra.mxu0 0
        %416 = vmatprep.subr.bf16.mxu0 0
        %417 = vmatpush2.bf16.msra.mxu0 0
        %418 = vmatprep.mubr.bf16.mxu0 0
        %419 = vmatmul.mubr.bf16.gmra.mxu0 %v374
        %v420 = vpop.f32.mrf.mxu0
        %v421 = vadd.f32 0.0, %v420
        %v422 = vpop.f32.mrf.mxu0
        %v423 = vadd.f32 0.0, %v422
        %v424 = vpop.f32.mrf.mxu0
        %v425 = vadd.f32 0.0, %v424
        %v426 = vpop.f32.mrf.mxu0
        %v427 = vadd.f32 0.0, %v426
        %428 = vmatprep.mubr.bf16.mxu0 0
        %429 = vmatmul.mubr.bf16.gmra.mxu0 %v377
        %v430 = vpop.f32.mrf.mxu0
        %v431 = vadd.f32 0.0, %v430
        %v432 = vpop.f32.mrf.mxu0
        %v433 = vadd.f32 0.0, %v432
        %v434 = vpop.f32.mrf.mxu0
        %v435 = vadd.f32 0.0, %v434
        %v436 = vpop.f32.mrf.mxu0
        %v437 = vadd.f32 0.0, %v436
        %438 = vdwg.mxu0
        %v443 = vunpack.c.l.b16 %v327
        %v444 = vunpack.c.l.b16 %v328
        %v445 = vunpack.c.l.b16 %v329
        %v446 = vunpack.c.l.b16 %v330
        %v447 = vpack.c.b16 %v444, %v443
        %v448 = vpack.c.b16 %v446, %v445
        %v450 = vcombine.high %v326, %v326
        %v452 = vunpack.c.l.s4 1983009808
        %v453 = vunpack.c.0.s8 %v452
        %v454 = vlaneseq
        %v455 = vshrl.u32 %v454, 7
        %v456 = vsub.s32 %v453, %v455
        %v457 = vrot.slane %v326, %v456
        %v459 = vunpack.c.l.s4 1983009808
        %v460 = vunpack.c.0.s8 %v459
        %v461 = vlaneseq
        %v462 = vshrl.u32 %v461, 7
        %v463 = vsub.s32 %v460, %v462
        %v464 = vrot.slane %v450, %v463
        %v465 = vcombine.high %v457, %v457
        %466 = vrot.lane.b32.xlu0 %v457, 17
        %v467 = vpop.permute.xlu0 %466
        %468 = vrot.lane.b32.xlu0 %v465, 17
        %v469 = vpop.permute.xlu0 %468
        %470 = vrot.lane.b32.xlu0 %v464, 17
        %v471 = vpop.permute.xlu0 %470
        %vm472 = vcmask 138240
        %v473 = vsel %vm472, %v467, %v469
        %v474 = vsel %vm472, %v469, %v471
        %v476 = vsel %vm372, %v447, 0
        %v479 = vsel %vm372, %v448, 0
        %v482 = vsel %vm379, %v473, 0
        %v485 = vsel %vm379, %v474, 0
        %487 = vmatprep.subr.bf16.mxu0 0
        %488 = vmatpush1.bf16.msra.mxu0 0
        %489 = vmatprep.subr.bf16.mxu0 0
        %490 = vmatpush1.bf16.msra.mxu0 0
        %491 = vmatprep.subr.bf16.mxu0 0
        %492 = vmatpush1.bf16.msra.mxu0 0
        %493 = vmatprep.subr.bf16.mxu0 0
        %494 = vmatpush1.bf16.msra.mxu0 0
        %495 = vmatprep.subr.bf16.mxu0 0
        %496 = vmatpush1.bf16.msra.mxu0 0
        %497 = vmatprep.subr.bf16.mxu0 0
        %498 = vmatpush1.bf16.msra.mxu0 0
        %499 = vmatprep.subr.bf16.mxu0 0
        %500 = vmatpush1.bf16.msra.mxu0 0
        %501 = vmatprep.subr.bf16.mxu0 %v485
        %502 = vmatpush1.bf16.msra.mxu0 %v482
        %503 = vmatprep.subr.bf16.mxu0 0
        %504 = vmatpush2.bf16.msra.mxu0 0
        %505 = vmatprep.subr.bf16.mxu0 0
        %506 = vmatpush2.bf16.msra.mxu0 0
        %507 = vmatprep.subr.bf16.mxu0 0
        %508 = vmatpush2.bf16.msra.mxu0 0
        %509 = vmatprep.subr.bf16.mxu0 0
        %510 = vmatpush2.bf16.msra.mxu0 0
        %511 = vmatprep.subr.bf16.mxu0 0
        %512 = vmatpush2.bf16.msra.mxu0 0
        %513 = vmatprep.subr.bf16.mxu0 0
        %514 = vmatpush2.bf16.msra.mxu0 0
        %515 = vmatprep.subr.bf16.mxu0 0
        %516 = vmatpush2.bf16.msra.mxu0 0
        %517 = vmatprep.subr.bf16.mxu0 0
        %518 = vmatpush2.bf16.msra.mxu0 0
        %519 = vmatprep.mubr.bf16.mxu0 0
        %520 = vmatmul.mubr.bf16.gmra.mxu0 %v476
        %v521 = vpop.f32.mrf.mxu0
        %v522 = vadd.f32 %v421, %v521
        %v523 = vpop.f32.mrf.mxu0
        %v524 = vadd.f32 %v423, %v523
        %v525 = vpop.f32.mrf.mxu0
        %v526 = vadd.f32 %v425, %v525
        %v527 = vpop.f32.mrf.mxu0
        %v528 = vadd.f32 %v427, %v527
        %529 = vmatprep.mubr.bf16.mxu0 0
        %530 = vmatmul.mubr.bf16.gmra.mxu0 %v479
        %v531 = vpop.f32.mrf.mxu0
        %v532 = vadd.f32 %v431, %v531
        %v533 = vpop.f32.mrf.mxu0
        %v534 = vadd.f32 %v433, %v533
        %v535 = vpop.f32.mrf.mxu0
        %v536 = vadd.f32 %v435, %v535
        %v537 = vpop.f32.mrf.mxu0
        %v538 = vadd.f32 %v437, %v537
        %539 = vdwg.mxu0
        %v540 = vld [vmem:[%s264] sm:$0x3f]
        %v541 = vshrl.u32 %v288, 16
        %v542 = vpack.i.b16 %v541, %v541
        %v544 = vlaneseq
        %v545 = vshrl.u32 %v544, 7
        %v546 = vsub.s32 0, %v545
        %v547 = vrot.slane %v542, %v546
        %v548 = vshrl.u32 %v295, 16
        %v549 = vpack.i.b16 %v548, %v548
        %v551 = vlaneseq
        %v552 = vshrl.u32 %v551, 7
        %v553 = vsub.s32 0, %v552
        %v554 = vrot.slane %v549, %v553
        %v557 = vcombine.low %v547, %v554
        %v559 = vunpack.c.l.s4 1983009808
        %v560 = vunpack.c.0.s8 %v559
        %v561 = vlaneseq
        %v562 = vshrl.u32 %v561, 7
        %v563 = vsub.s32 %v560, %v562
        %v564 = vrot.slane %v557, %v563
        %565 = vrot.lane.b32.xlu0 %v564, 113
        %v566 = vpop.permute.xlu0 %565
        %v567 = vrot.slane %v566, 6
        %vm568 = vcmask 924672
        %v569 = vsel %vm568, %v567, %v566
        %v571 = vmul.bf16 %v540, %v569
        %s572 = scalar_lea.vmem %s3, 32
        %v573 = vld [vmem:[%s572] sm:$0xf]
        %v574 = vld [vmem:[%s572 + $0x4] sm:$0xf]
        %v575 = vld [vmem:[%s572 + $0x8] sm:$0xf]
        %v576 = vld [vmem:[%s572 + $0xc] sm:$0xf]
        %v581 = vunpack.c.l.b16 %v573
        %v582 = vunpack.c.l.b16 %v574
        %v583 = vunpack.c.l.b16 %v575
        %v584 = vunpack.c.l.b16 %v576
        %v585 = vpack.c.b16 %v582, %v581
        %v586 = vpack.c.b16 %v584, %v583
        %v588 = vcombine.high %v571, %v571
        %v590 = vunpack.c.l.s4 1983009808
        %v591 = vunpack.c.0.s8 %v590
        %v592 = vlaneseq
        %v593 = vshrl.u32 %v592, 7
        %v594 = vsub.s32 %v591, %v593
        %v595 = vrot.slane %v571, %v594
        %v597 = vunpack.c.l.s4 1983009808
        %v598 = vunpack.c.0.s8 %v597
        %v599 = vlaneseq
        %v600 = vshrl.u32 %v599, 7
        %v601 = vsub.s32 %v598, %v600
        %v602 = vrot.slane %v588, %v601
        %v603 = vcombine.high %v595, %v595
        %604 = vrot.lane.b32.xlu0 %v595, 15
        %v605 = vpop.permute.xlu0 %604
        %606 = vrot.lane.b32.xlu0 %v603, 15
        %v607 = vpop.permute.xlu0 %606
        %608 = vrot.lane.b32.xlu0 %v602, 15
        %v609 = vpop.permute.xlu0 %608
        %vm610 = vcmask 121856
        %v611 = vsel %vm610, %v605, %v607
        %v612 = vsel %vm610, %v607, %v609
        %v614 = vsel %vm372, %v585, 0
        %v617 = vsel %vm372, %v586, 0
        %v620 = vsel %vm379, %v611, 0
        %v623 = vsel %vm379, %v612, 0
        %625 = vmatprep.subr.bf16.mxu0 0
        %626 = vmatpush1.bf16.msra.mxu0 0
        %627 = vmatprep.subr.bf16.mxu0 0
        %628 = vmatpush1.bf16.msra.mxu0 0
        %629 = vmatprep.subr.bf16.mxu0 0
        %630 = vmatpush1.bf16.msra.mxu0 0
        %631 = vmatprep.subr.bf16.mxu0 0
        %632 = vmatpush1.bf16.msra.mxu0 0
        %633 = vmatprep.subr.bf16.mxu0 0
        %634 = vmatpush1.bf16.msra.mxu0 0
        %635 = vmatprep.subr.bf16.mxu0 0
        %636 = vmatpush1.bf16.msra.mxu0 0
        %637 = vmatprep.subr.bf16.mxu0 0
        %638 = vmatpush1.bf16.msra.mxu0 0
        %639 = vmatprep.subr.bf16.mxu0 %v623
        %640 = vmatpush1.bf16.msra.mxu0 %v620
        %641 = vmatprep.subr.bf16.mxu0 0
        %642 = vmatpush2.bf16.msra.mxu0 0
        %643 = vmatprep.subr.bf16.mxu0 0
        %644 = vmatpush2.bf16.msra.mxu0 0
        %645 = vmatprep.subr.bf16.mxu0 0
        %646 = vmatpush2.bf16.msra.mxu0 0
        %647 = vmatprep.subr.bf16.mxu0 0
        %648 = vmatpush2.bf16.msra.mxu0 0
        %649 = vmatprep.subr.bf16.mxu0 0
        %650 = vmatpush2.bf16.msra.mxu0 0
        %651 = vmatprep.subr.bf16.mxu0 0
        %652 = vmatpush2.bf16.msra.mxu0 0
        %653 = vmatprep.subr.bf16.mxu0 0
        %654 = vmatpush2.bf16.msra.mxu0 0
        %655 = vmatprep.subr.bf16.mxu0 0
        %656 = vmatpush2.bf16.msra.mxu0 0
        %657 = vmatprep.mubr.bf16.mxu0 0
        %658 = vmatmul.mubr.bf16.gmra.mxu0 %v614
        %v659 = vpop.f32.mrf.mxu0
        %v660 = vadd.f32 0.0, %v659
        %v661 = vpop.f32.mrf.mxu0
        %v662 = vadd.f32 0.0, %v661
        %v663 = vpop.f32.mrf.mxu0
        %v664 = vadd.f32 0.0, %v663
        %v665 = vpop.f32.mrf.mxu0
        %v666 = vadd.f32 0.0, %v665
        %667 = vmatprep.mubr.bf16.mxu0 0
        %668 = vmatmul.mubr.bf16.gmra.mxu0 %v617
        %v669 = vpop.f32.mrf.mxu0
        %v670 = vadd.f32 0.0, %v669
        %v671 = vpop.f32.mrf.mxu0
        %v672 = vadd.f32 0.0, %v671
        %v673 = vpop.f32.mrf.mxu0
        %v674 = vadd.f32 0.0, %v673
        %v675 = vpop.f32.mrf.mxu0
        %v676 = vadd.f32 0.0, %v675
        %677 = vdwg.mxu0
        %v678 = vadd.f32 %v522, %v660
        %v679 = vadd.f32 %v524, %v662
        %v680 = vadd.f32 %v526, %v664
        %v681 = vadd.f32 %v528, %v666
        %v682 = vadd.f32 %v532, %v670
        %v683 = vadd.f32 %v534, %v672
        %v684 = vadd.f32 %v536, %v674
        %v685 = vadd.f32 %v538, %v676
        %v686 = vld [vmem:[%s264] sm:$0x3f]
        %687 = vrot.lane.b32.xlu0 %v319, 127
        %v688 = vpop.permute.xlu0 %687
        %v689 = vrot.slane %v688, 6
        %vm690 = vcmask 1039360
        %v691 = vsel %vm690, %v689, %v688
        %v693 = vmul.bf16 %v686, %v691
        %s694 = scalar_lea.vmem %s3, 48
        %v695 = vld [vmem:[%s694] sm:$0xf]
        %v696 = vld [vmem:[%s694 + $0x4] sm:$0xf]
        %v697 = vld [vmem:[%s694 + $0x8] sm:$0xf]
        %v698 = vld [vmem:[%s694 + $0xc] sm:$0xf]
        %v703 = vunpack.c.l.b16 %v695
        %v704 = vunpack.c.l.b16 %v696
        %v705 = vunpack.c.l.b16 %v697
        %v706 = vunpack.c.l.b16 %v698
        %v707 = vpack.c.b16 %v704, %v703
        %v708 = vpack.c.b16 %v706, %v705
        %v710 = vcombine.high %v693, %v693
        %v712 = vunpack.c.l.s4 1983009808
        %v713 = vunpack.c.0.s8 %v712
        %v714 = vlaneseq
        %v715 = vshrl.u32 %v714, 7
        %v716 = vsub.s32 %v713, %v715
        %v717 = vrot.slane %v693, %v716
        %v719 = vunpack.c.l.s4 1983009808
        %v720 = vunpack.c.0.s8 %v719
        %v721 = vlaneseq
        %v722 = vshrl.u32 %v721, 7
        %v723 = vsub.s32 %v720, %v722
        %v724 = vrot.slane %v710, %v723
        %v725 = vcombine.high %v717, %v717
        %726 = vrot.lane.b32.xlu0 %v717, 1
        %v727 = vpop.permute.xlu0 %726
        %728 = vrot.lane.b32.xlu0 %v725, 1
        %v729 = vpop.permute.xlu0 %728
        %730 = vrot.lane.b32.xlu0 %v724, 1
        %v731 = vpop.permute.xlu0 %730
        %vm732 = vcmask 7168
        %v733 = vsel %vm732, %v727, %v729
        %v734 = vsel %vm732, %v729, %v731
        %v736 = vsel %vm372, %v707, 0
        %v739 = vsel %vm372, %v708, 0
        %v742 = vsel %vm379, %v733, 0
        %v745 = vsel %vm379, %v734, 0
        %747 = vmatprep.subr.bf16.mxu0 0
        %748 = vmatpush1.bf16.msra.mxu0 0
        %749 = vmatprep.subr.bf16.mxu0 0
        %750 = vmatpush1.bf16.msra.mxu0 0
        %751 = vmatprep.subr.bf16.mxu0 0
        %752 = vmatpush1.bf16.msra.mxu0 0
        %753 = vmatprep.subr.bf16.mxu0 0
        %754 = vmatpush1.bf16.msra.mxu0 0
        %755 = vmatprep.subr.bf16.mxu0 0
        %756 = vmatpush1.bf16.msra.mxu0 0
        %757 = vmatprep.subr.bf16.mxu0 0
        %758 = vmatpush1.bf16.msra.mxu0 0
        %759 = vmatprep.subr.bf16.mxu0 0
        %760 = vmatpush1.bf16.msra.mxu0 0
        %761 = vmatprep.subr.bf16.mxu0 %v745
        %762 = vmatpush1.bf16.msra.mxu0 %v742
        %763 = vmatprep.subr.bf16.mxu0 0
        %764 = vmatpush2.bf16.msra.mxu0 0
        %765 = vmatprep.subr.bf16.mxu0 0
        %766 = vmatpush2.bf16.msra.mxu0 0
        %767 = vmatprep.subr.bf16.mxu0 0
        %768 = vmatpush2.bf16.msra.mxu0 0
        %769 = vmatprep.subr.bf16.mxu0 0
        %770 = vmatpush2.bf16.msra.mxu0 0
        %771 = vmatprep.subr.bf16.mxu0 0
        %772 = vmatpush2.bf16.msra.mxu0 0
        %773 = vmatprep.subr.bf16.mxu0 0
        %774 = vmatpush2.bf16.msra.mxu0 0
        %775 = vmatprep.subr.bf16.mxu0 0
        %776 = vmatpush2.bf16.msra.mxu0 0
        %777 = vmatprep.subr.bf16.mxu0 0
        %778 = vmatpush2.bf16.msra.mxu0 0
        %779 = vmatprep.mubr.bf16.mxu0 0
        %780 = vmatmul.mubr.bf16.gmra.mxu0 %v736
        %v781 = vpop.f32.mrf.mxu0
        %v782 = vadd.f32 0.0, %v781
        %v783 = vpop.f32.mrf.mxu0
        %v784 = vadd.f32 0.0, %v783
        %v785 = vpop.f32.mrf.mxu0
        %v786 = vadd.f32 0.0, %v785
        %v787 = vpop.f32.mrf.mxu0
        %v788 = vadd.f32 0.0, %v787
        %789 = vmatprep.mubr.bf16.mxu0 0
        %790 = vmatmul.mubr.bf16.gmra.mxu0 %v739
        %v791 = vpop.f32.mrf.mxu0
        %v792 = vadd.f32 0.0, %v791
        %v793 = vpop.f32.mrf.mxu0
        %v794 = vadd.f32 0.0, %v793
        %v795 = vpop.f32.mrf.mxu0
        %v796 = vadd.f32 0.0, %v795
        %v797 = vpop.f32.mrf.mxu0
        %v798 = vadd.f32 0.0, %v797
        %799 = vdwg.mxu0
        %v800 = vadd.f32 %v678, %v782
        %v801 = vadd.f32 %v679, %v784
        %v802 = vadd.f32 %v680, %v786
        %v803 = vadd.f32 %v681, %v788
        %v804 = vadd.f32 %v682, %v792
        %v805 = vadd.f32 %v683, %v794
        %v806 = vadd.f32 %v684, %v796
        %v807 = vadd.f32 %v685, %v798
        %v808 = vld [vmem:[%s264 + $0x2] sm:$0xf]
        %s809 = scalar_lea.vmem %s3, 64
        %v810 = vld [vmem:[%s809] sm:$0xf]
        %v811 = vld [vmem:[%s809 + $0x4] sm:$0xf]
        %v812 = vld [vmem:[%s809 + $0x8] sm:$0xf]
        %v813 = vld [vmem:[%s809 + $0xc] sm:$0xf]
        %v818 = vunpack.c.l.b16 %v810
        %v819 = vunpack.c.l.b16 %v811
        %v820 = vunpack.c.l.b16 %v812
        %v821 = vunpack.c.l.b16 %v813
        %v822 = vpack.c.b16 %v819, %v818
        %v823 = vpack.c.b16 %v821, %v820
        %v826 = vunpack.c.l.s4 1983009808
        %v827 = vunpack.c.0.s8 %v826
        %v828 = vlaneseq
        %v829 = vshrl.u32 %v828, 7
        %v830 = vsub.s32 %v827, %v829
        %v831 = vrot.slane %v808, %v830
        %v832 = vcombine.high %v831, %v831
        %v834 = vsel %vm372, %v822, 0
        %v837 = vsel %vm372, %v823, 0
        %v840 = vsel %vm379, %v831, 0
        %v843 = vsel %vm379, %v832, 0
        %845 = vmatprep.subr.bf16.mxu0 0
        %846 = vmatpush1.bf16.msra.mxu0 0
        %847 = vmatprep.subr.bf16.mxu0 0
        %848 = vmatpush1.bf16.msra.mxu0 0
        %849 = vmatprep.subr.bf16.mxu0 0
        %850 = vmatpush1.bf16.msra.mxu0 0
        %851 = vmatprep.subr.bf16.mxu0 0
        %852 = vmatpush1.bf16.msra.mxu0 0
        %853 = vmatprep.subr.bf16.mxu0 0
        %854 = vmatpush1.bf16.msra.mxu0 0
        %855 = vmatprep.subr.bf16.mxu0 0
        %856 = vmatpush1.bf16.msra.mxu0 0
        %857 = vmatprep.subr.bf16.mxu0 0
        %858 = vmatpush1.bf16.msra.mxu0 0
        %859 = vmatprep.subr.bf16.mxu0 %v843
        %860 = vmatpush1.bf16.msra.mxu0 %v840
        %861 = vmatprep.subr.bf16.mxu0 0
        %862 = vmatpush2.bf16.msra.mxu0 0
        %863 = vmatprep.subr.bf16.mxu0 0
        %864 = vmatpush2.bf16.msra.mxu0 0
        %865 = vmatprep.subr.bf16.mxu0 0
        %866 = vmatpush2.bf16.msra.mxu0 0
        %867 = vmatprep.subr.bf16.mxu0 0
        %868 = vmatpush2.bf16.msra.mxu0 0
        %869 = vmatprep.subr.bf16.mxu0 0
        %870 = vmatpush2.bf16.msra.mxu0 0
        %871 = vmatprep.subr.bf16.mxu0 0
        %872 = vmatpush2.bf16.msra.mxu0 0
        %873 = vmatprep.subr.bf16.mxu0 0
        %874 = vmatpush2.bf16.msra.mxu0 0
        %875 = vmatprep.subr.bf16.mxu0 0
        %876 = vmatpush2.bf16.msra.mxu0 0
        %877 = vmatprep.mubr.bf16.mxu0 0
        %878 = vmatmul.mubr.bf16.gmra.mxu0 %v834
        %v879 = vpop.f32.mrf.mxu0
        %v880 = vadd.f32 0.0, %v879
        %v881 = vpop.f32.mrf.mxu0
        %v882 = vadd.f32 0.0, %v881
        %v883 = vpop.f32.mrf.mxu0
        %v884 = vadd.f32 0.0, %v883
        %v885 = vpop.f32.mrf.mxu0
        %v886 = vadd.f32 0.0, %v885
        %887 = vmatprep.mubr.bf16.mxu0 0
        %888 = vmatmul.mubr.bf16.gmra.mxu0 %v837
        %v889 = vpop.f32.mrf.mxu0
        %v890 = vadd.f32 0.0, %v889
        %v891 = vpop.f32.mrf.mxu0
        %v892 = vadd.f32 0.0, %v891
        %v893 = vpop.f32.mrf.mxu0
        %v894 = vadd.f32 0.0, %v893
        %v895 = vpop.f32.mrf.mxu0
        %v896 = vadd.f32 0.0, %v895
        %897 = vdwg.mxu0
        %v898 = vadd.f32 %v800, %v880
        %v899 = vadd.f32 %v801, %v882
        %v900 = vadd.f32 %v802, %v884
        %v901 = vadd.f32 %v803, %v886
        %v902 = vadd.f32 %v804, %v890
        %v903 = vadd.f32 %v805, %v892
        %v904 = vadd.f32 %v806, %v894
        %v905 = vadd.f32 %v807, %v896
        %v906 = vld [vmem:[%s264 + $0x2] sm:$0x3f]
        %907 = vrot.lane.b32.xlu0 %v564, 1
        %v908 = vpop.permute.xlu0 %907
        %v909 = vrot.slane %v908, 6
        %v910 = vsel %vm732, %v909, %v908
        %v912 = vmul.bf16 %v906, %v910
        %s913 = scalar_lea.vmem %s3, 80
        %v914 = vld [vmem:[%s913] sm:$0xf]
        %v915 = vld [vmem:[%s913 + $0x4] sm:$0xf]
        %v916 = vld [vmem:[%s913 + $0x8] sm:$0xf]
        %v917 = vld [vmem:[%s913 + $0xc] sm:$0xf]
        %v922 = vunpack.c.l.b16 %v914
        %v923 = vunpack.c.l.b16 %v915
        %v924 = vunpack.c.l.b16 %v916
        %v925 = vunpack.c.l.b16 %v917
        %v926 = vpack.c.b16 %v923, %v922
        %v927 = vpack.c.b16 %v925, %v924
        %v929 = vcombine.high %v912, %v912
        %v931 = vunpack.c.l.s4 1983009808
        %v932 = vunpack.c.0.s8 %v931
        %v933 = vlaneseq
        %v934 = vshrl.u32 %v933, 7
        %v935 = vsub.s32 %v932, %v934
        %v936 = vrot.slane %v912, %v935
        %v938 = vunpack.c.l.s4 1983009808
        %v939 = vunpack.c.0.s8 %v938
        %v940 = vlaneseq
        %v941 = vshrl.u32 %v940, 7
        %v942 = vsub.s32 %v939, %v941
        %v943 = vrot.slane %v929, %v942
        %v944 = vcombine.high %v936, %v936
        %945 = vrot.lane.b32.xlu0 %v936, 127
        %v946 = vpop.permute.xlu0 %945
        %947 = vrot.lane.b32.xlu0 %v944, 127
        %v948 = vpop.permute.xlu0 %947
        %949 = vrot.lane.b32.xlu0 %v943, 127
        %v950 = vpop.permute.xlu0 %949
        %v951 = vsel %vm690, %v946, %v948
        %v952 = vsel %vm690, %v948, %v950
        %v954 = vsel %vm372, %v926, 0
        %v957 = vsel %vm372, %v927, 0
        %v960 = vsel %vm379, %v951, 0
        %v963 = vsel %vm379, %v952, 0
        %965 = vmatprep.subr.bf16.mxu0 0
        %966 = vmatpush1.bf16.msra.mxu0 0
        %967 = vmatprep.subr.bf16.mxu0 0
        %968 = vmatpush1.bf16.msra.mxu0 0
        %969 = vmatprep.subr.bf16.mxu0 0
        %970 = vmatpush1.bf16.msra.mxu0 0
        %971 = vmatprep.subr.bf16.mxu0 0
        %972 = vmatpush1.bf16.msra.mxu0 0
        %973 = vmatprep.subr.bf16.mxu0 0
        %974 = vmatpush1.bf16.msra.mxu0 0
        %975 = vmatprep.subr.bf16.mxu0 0
        %976 = vmatpush1.bf16.msra.mxu0 0
        %977 = vmatprep.subr.bf16.mxu0 0
        %978 = vmatpush1.bf16.msra.mxu0 0
        %979 = vmatprep.subr.bf16.mxu0 %v963
        %980 = vmatpush1.bf16.msra.mxu0 %v960
        %981 = vmatprep.subr.bf16.mxu0 0
        %982 = vmatpush2.bf16.msra.mxu0 0
        %983 = vmatprep.subr.bf16.mxu0 0
        %984 = vmatpush2.bf16.msra.mxu0 0
        %985 = vmatprep.subr.bf16.mxu0 0
        %986 = vmatpush2.bf16.msra.mxu0 0
        %987 = vmatprep.subr.bf16.mxu0 0
        %988 = vmatpush2.bf16.msra.mxu0 0
        %989 = vmatprep.subr.bf16.mxu0 0
        %990 = vmatpush2.bf16.msra.mxu0 0
        %991 = vmatprep.subr.bf16.mxu0 0
        %992 = vmatpush2.bf16.msra.mxu0 0
        %993 = vmatprep.subr.bf16.mxu0 0
        %994 = vmatpush2.bf16.msra.mxu0 0
        %995 = vmatprep.subr.bf16.mxu0 0
        %996 = vmatpush2.bf16.msra.mxu0 0
        %997 = vmatprep.mubr.bf16.mxu0 0
        %998 = vmatmul.mubr.bf16.gmra.mxu0 %v954
        %v999 = vpop.f32.mrf.mxu0
        %v1000 = vadd.f32 0.0, %v999
        %v1001 = vpop.f32.mrf.mxu0
        %v1002 = vadd.f32 0.0, %v1001
        %v1003 = vpop.f32.mrf.mxu0
        %v1004 = vadd.f32 0.0, %v1003
        %v1005 = vpop.f32.mrf.mxu0
        %v1006 = vadd.f32 0.0, %v1005
        %1007 = vmatprep.mubr.bf16.mxu0 0
        %1008 = vmatmul.mubr.bf16.gmra.mxu0 %v957
        %v1009 = vpop.f32.mrf.mxu0
        %v1010 = vadd.f32 0.0, %v1009
        %v1011 = vpop.f32.mrf.mxu0
        %v1012 = vadd.f32 0.0, %v1011
        %v1013 = vpop.f32.mrf.mxu0
        %v1014 = vadd.f32 0.0, %v1013
        %v1015 = vpop.f32.mrf.mxu0
        %v1016 = vadd.f32 0.0, %v1015
        %1017 = vdwg.mxu0
        %v1018 = vadd.f32 %v898, %v1000
        %v1019 = vadd.f32 %v899, %v1002
        %v1020 = vadd.f32 %v900, %v1004
        %v1021 = vadd.f32 %v901, %v1006
        %v1022 = vadd.f32 %v902, %v1010
        %v1023 = vadd.f32 %v903, %v1012
        %v1024 = vadd.f32 %v904, %v1014
        %v1025 = vadd.f32 %v905, %v1016
        %v1026 = vld [vmem:[%s264 + $0x2] sm:$0x3f]
        %1027 = vrot.lane.b32.xlu0 %v319, 15
        %v1028 = vpop.permute.xlu0 %1027
        %v1029 = vrot.slane %v1028, 6
        %v1030 = vsel %vm610, %v1029, %v1028
        %v1032 = vmul.bf16 %v1026, %v1030
        %s1033 = scalar_lea.vmem %s3, 96
        %v1034 = vld [vmem:[%s1033] sm:$0xf]
        %v1035 = vld [vmem:[%s1033 + $0x4] sm:$0xf]
        %v1036 = vld [vmem:[%s1033 + $0x8] sm:$0xf]
        %v1037 = vld [vmem:[%s1033 + $0xc] sm:$0xf]
        %v1042 = vunpack.c.l.b16 %v1034
        %v1043 = vunpack.c.l.b16 %v1035
        %v1044 = vunpack.c.l.b16 %v1036
        %v1045 = vunpack.c.l.b16 %v1037
        %v1046 = vpack.c.b16 %v1043, %v1042
        %v1047 = vpack.c.b16 %v1045, %v1044
        %v1049 = vcombine.high %v1032, %v1032
        %v1051 = vunpack.c.l.s4 1983009808
        %v1052 = vunpack.c.0.s8 %v1051
        %v1053 = vlaneseq
        %v1054 = vshrl.u32 %v1053, 7
        %v1055 = vsub.s32 %v1052, %v1054
        %v1056 = vrot.slane %v1032, %v1055
        %v1058 = vunpack.c.l.s4 1983009808
        %v1059 = vunpack.c.0.s8 %v1058
        %v1060 = vlaneseq
        %v1061 = vshrl.u32 %v1060, 7
        %v1062 = vsub.s32 %v1059, %v1061
        %v1063 = vrot.slane %v1049, %v1062
        %v1064 = vcombine.high %v1056, %v1056
        %1065 = vrot.lane.b32.xlu0 %v1056, 113
        %v1066 = vpop.permute.xlu0 %1065
        %1067 = vrot.lane.b32.xlu0 %v1064, 113
        %v1068 = vpop.permute.xlu0 %1067
        %1069 = vrot.lane.b32.xlu0 %v1063, 113
        %v1070 = vpop.permute.xlu0 %1069
        %v1071 = vsel %vm568, %v1066, %v1068
        %v1072 = vsel %vm568, %v1068, %v1070
        %v1074 = vsel %vm372, %v1046, 0
        %v1077 = vsel %vm372, %v1047, 0
        %v1080 = vsel %vm379, %v1071, 0
        %v1083 = vsel %vm379, %v1072, 0
        %1085 = vmatprep.subr.bf16.mxu0 0
        %1086 = vmatpush1.bf16.msra.mxu0 0
        %1087 = vmatprep.subr.bf16.mxu0 0
        %1088 = vmatpush1.bf16.msra.mxu0 0
        %1089 = vmatprep.subr.bf16.mxu0 0
        %1090 = vmatpush1.bf16.msra.mxu0 0
        %1091 = vmatprep.subr.bf16.mxu0 0
        %1092 = vmatpush1.bf16.msra.mxu0 0
        %1093 = vmatprep.subr.bf16.mxu0 0
        %1094 = vmatpush1.bf16.msra.mxu0 0
        %1095 = vmatprep.subr.bf16.mxu0 0
        %1096 = vmatpush1.bf16.msra.mxu0 0
        %1097 = vmatprep.subr.bf16.mxu0 0
        %1098 = vmatpush1.bf16.msra.mxu0 0
        %1099 = vmatprep.subr.bf16.mxu0 %v1083
        %1100 = vmatpush1.bf16.msra.mxu0 %v1080
        %1101 = vmatprep.subr.bf16.mxu0 0
        %1102 = vmatpush2.bf16.msra.mxu0 0
        %1103 = vmatprep.subr.bf16.mxu0 0
        %1104 = vmatpush2.bf16.msra.mxu0 0
        %1105 = vmatprep.subr.bf16.mxu0 0
        %1106 = vmatpush2.bf16.msra.mxu0 0
        %1107 = vmatprep.subr.bf16.mxu0 0
        %1108 = vmatpush2.bf16.msra.mxu0 0
        %1109 = vmatprep.subr.bf16.mxu0 0
        %1110 = vmatpush2.bf16.msra.mxu0 0
        %1111 = vmatprep.subr.bf16.mxu0 0
        %1112 = vmatpush2.bf16.msra.mxu0 0
        %1113 = vmatprep.subr.bf16.mxu0 0
        %1114 = vmatpush2.bf16.msra.mxu0 0
        %1115 = vmatprep.subr.bf16.mxu0 0
        %1116 = vmatpush2.bf16.msra.mxu0 0
        %1117 = vmatprep.mubr.bf16.mxu0 0
        %1118 = vmatmul.mubr.bf16.gmra.mxu0 %v1074
        %v1119 = vpop.f32.mrf.mxu0
        %v1120 = vadd.f32 0.0, %v1119
        %v1121 = vpop.f32.mrf.mxu0
        %v1122 = vadd.f32 0.0, %v1121
        %v1123 = vpop.f32.mrf.mxu0
        %v1124 = vadd.f32 0.0, %v1123
        %v1125 = vpop.f32.mrf.mxu0
        %v1126 = vadd.f32 0.0, %v1125
        %1127 = vmatprep.mubr.bf16.mxu0 0
        %1128 = vmatmul.mubr.bf16.gmra.mxu0 %v1077
        %v1129 = vpop.f32.mrf.mxu0
        %v1130 = vadd.f32 0.0, %v1129
        %v1131 = vpop.f32.mrf.mxu0
        %v1132 = vadd.f32 0.0, %v1131
        %v1133 = vpop.f32.mrf.mxu0
        %v1134 = vadd.f32 0.0, %v1133
        %v1135 = vpop.f32.mrf.mxu0
        %v1136 = vadd.f32 0.0, %v1135
        %1137 = vdwg.mxu0
        %v1138 = vadd.f32 %v1018, %v1120
        %v1139 = vadd.f32 %v1019, %v1122
        %v1140 = vadd.f32 %v1020, %v1124
        %v1141 = vadd.f32 %v1021, %v1126
        %v1142 = vadd.f32 %v1022, %v1130
        %v1143 = vadd.f32 %v1023, %v1132
        %v1144 = vadd.f32 %v1024, %v1134
        %v1145 = vadd.f32 %v1025, %v1136
        %v1146 = vld [vmem:[%s264 + $0x2] sm:$0x3f]
        %s1147 = scalar_lea.vmem %s3, 112
        %v1148 = vld [vmem:[%s1147] sm:$0xf]
        %v1149 = vld [vmem:[%s1147 + $0x4] sm:$0xf]
        %v1150 = vld [vmem:[%s1147 + $0x8] sm:$0xf]
        %v1151 = vld [vmem:[%s1147 + $0xc] sm:$0xf]
        %v1156 = vunpack.c.l.b16 %v1148
        %v1157 = vunpack.c.l.b16 %v1149
        %v1158 = vunpack.c.l.b16 %v1150
        %v1159 = vunpack.c.l.b16 %v1151
        %v1160 = vpack.c.b16 %v1157, %v1156
        %v1161 = vpack.c.b16 %v1159, %v1158
        %v1163 = vcombine.high %v1146, %v1146
        %v1165 = vunpack.c.l.s4 1983009808
        %v1166 = vunpack.c.0.s8 %v1165
        %v1167 = vlaneseq
        %v1168 = vshrl.u32 %v1167, 7
        %v1169 = vsub.s32 %v1166, %v1168
        %v1170 = vrot.slane %v1146, %v1169
        %v1172 = vunpack.c.l.s4 1983009808
        %v1173 = vunpack.c.0.s8 %v1172
        %v1174 = vlaneseq
        %v1175 = vshrl.u32 %v1174, 7
        %v1176 = vsub.s32 %v1173, %v1175
        %v1177 = vrot.slane %v1163, %v1176
        %v1178 = vcombine.high %v1170, %v1170
        %1179 = vrot.lane.b32.xlu0 %v1170, 112
        %v1180 = vpop.permute.xlu0 %1179
        %1181 = vrot.lane.b32.xlu0 %v1178, 112
        %v1182 = vpop.permute.xlu0 %1181
        %1183 = vrot.lane.b32.xlu0 %v1177, 112
        %v1184 = vpop.permute.xlu0 %1183
        %vm1185 = vcmask 916480
        %v1186 = vsel %vm1185, %v1180, %v1182
        %v1187 = vsel %vm1185, %v1182, %v1184
        %v1189 = vsel %vm372, %v1160, 0
        %v1192 = vsel %vm372, %v1161, 0
        %v1195 = vsel %vm379, %v1186, 0
        %v1198 = vsel %vm379, %v1187, 0
        %1200 = vmatprep.subr.bf16.mxu0 0
        %1201 = vmatpush1.bf16.msra.mxu0 0
        %1202 = vmatprep.subr.bf16.mxu0 0
        %1203 = vmatpush1.bf16.msra.mxu0 0
        %1204 = vmatprep.subr.bf16.mxu0 0
        %1205 = vmatpush1.bf16.msra.mxu0 0
        %1206 = vmatprep.subr.bf16.mxu0 0
        %1207 = vmatpush1.bf16.msra.mxu0 0
        %1208 = vmatprep.subr.bf16.mxu0 0
        %1209 = vmatpush1.bf16.msra.mxu0 0
        %1210 = vmatprep.subr.bf16.mxu0 0
        %1211 = vmatpush1.bf16.msra.mxu0 0
        %1212 = vmatprep.subr.bf16.mxu0 0
        %1213 = vmatpush1.bf16.msra.mxu0 0
        %1214 = vmatprep.subr.bf16.mxu0 %v1198
        %1215 = vmatpush1.bf16.msra.mxu0 %v1195
        %1216 = vmatprep.subr.bf16.mxu0 0
        %1217 = vmatpush2.bf16.msra.mxu0 0
        %1218 = vmatprep.subr.bf16.mxu0 0
        %1219 = vmatpush2.bf16.msra.mxu0 0
        %1220 = vmatprep.subr.bf16.mxu0 0
        %1221 = vmatpush2.bf16.msra.mxu0 0
        %1222 = vmatprep.subr.bf16.mxu0 0
        %1223 = vmatpush2.bf16.msra.mxu0 0
        %1224 = vmatprep.subr.bf16.mxu0 0
        %1225 = vmatpush2.bf16.msra.mxu0 0
        %1226 = vmatprep.subr.bf16.mxu0 0
        %1227 = vmatpush2.bf16.msra.mxu0 0
        %1228 = vmatprep.subr.bf16.mxu0 0
        %1229 = vmatpush2.bf16.msra.mxu0 0
        %1230 = vmatprep.subr.bf16.mxu0 0
        %1231 = vmatpush2.bf16.msra.mxu0 0
        %1232 = vmatprep.mubr.bf16.mxu0 0
        %1233 = vmatmul.mubr.bf16.gmra.mxu0 %v1189
        %v1234 = vpop.f32.mrf.mxu0
        %v1235 = vadd.f32 0.0, %v1234
        %v1236 = vpop.f32.mrf.mxu0
        %v1237 = vadd.f32 0.0, %v1236
        %v1238 = vpop.f32.mrf.mxu0
        %v1239 = vadd.f32 0.0, %v1238
        %v1240 = vpop.f32.mrf.mxu0
        %v1241 = vadd.f32 0.0, %v1240
        %1242 = vmatprep.mubr.bf16.mxu0 0
        %1243 = vmatmul.mubr.bf16.gmra.mxu0 %v1192
        %v1244 = vpop.f32.mrf.mxu0
        %v1245 = vadd.f32 0.0, %v1244
        %v1246 = vpop.f32.mrf.mxu0
        %v1247 = vadd.f32 0.0, %v1246
        %v1248 = vpop.f32.mrf.mxu0
        %v1249 = vadd.f32 0.0, %v1248
        %v1250 = vpop.f32.mrf.mxu0
        %v1251 = vadd.f32 0.0, %v1250
        %1252 = vdwg.mxu0
        %v1253 = vadd.f32 %v1138, %v1235
        %v1254 = vadd.f32 %v1139, %v1237
        %v1255 = vadd.f32 %v1140, %v1239
        %v1256 = vadd.f32 %v1141, %v1241
        %v1257 = vadd.f32 %v1142, %v1245
        %v1258 = vadd.f32 %v1143, %v1247
        %v1259 = vadd.f32 %v1144, %v1249
        %v1260 = vadd.f32 %v1145, %v1251
        %v1261 = vld [vmem:[%s264 + $0x2] sm:$0x3f]
        %1262 = vrot.lane.b32.xlu0 %v564, 17
        %v1263 = vpop.permute.xlu0 %1262
        %v1264 = vrot.slane %v1263, 6
        %v1265 = vsel %vm472, %v1264, %v1263
        %v1267 = vmul.bf16 %v1261, %v1265
        %s1268 = scalar_lea.vmem %s3, 128
        %v1269 = vld [vmem:[%s1268] sm:$0xf]
        %v1270 = vld [vmem:[%s1268 + $0x4] sm:$0xf]
        %v1271 = vld [vmem:[%s1268 + $0x8] sm:$0xf]
        %v1272 = vld [vmem:[%s1268 + $0xc] sm:$0xf]
        %v1277 = vunpack.c.l.b16 %v1269
        %v1278 = vunpack.c.l.b16 %v1270
        %v1279 = vunpack.c.l.b16 %v1271
        %v1280 = vunpack.c.l.b16 %v1272
        %v1281 = vpack.c.b16 %v1278, %v1277
        %v1282 = vpack.c.b16 %v1280, %v1279
        %v1284 = vcombine.high %v1267, %v1267
        %v1286 = vunpack.c.l.s4 1983009808
        %v1287 = vunpack.c.0.s8 %v1286
        %v1288 = vlaneseq
        %v1289 = vshrl.u32 %v1288, 7
        %v1290 = vsub.s32 %v1287, %v1289
        %v1291 = vrot.slane %v1267, %v1290
        %v1293 = vunpack.c.l.s4 1983009808
        %v1294 = vunpack.c.0.s8 %v1293
        %v1295 = vlaneseq
        %v1296 = vshrl.u32 %v1295, 7
        %v1297 = vsub.s32 %v1294, %v1296
        %v1298 = vrot.slane %v1284, %v1297
        %v1299 = vcombine.high %v1291, %v1291
        %1300 = vrot.lane.b32.xlu0 %v1291, 111
        %v1301 = vpop.permute.xlu0 %1300
        %1302 = vrot.lane.b32.xlu0 %v1299, 111
        %v1303 = vpop.permute.xlu0 %1302
        %1304 = vrot.lane.b32.xlu0 %v1298, 111
        %v1305 = vpop.permute.xlu0 %1304
        %v1306 = vsel %vm323, %v1301, %v1303
        %v1307 = vsel %vm323, %v1303, %v1305
        %v1309 = vsel %vm372, %v1281, 0
        %v1312 = vsel %vm372, %v1282, 0
        %v1315 = vsel %vm379, %v1306, 0
        %v1318 = vsel %vm379, %v1307, 0
        %1320 = vmatprep.subr.bf16.mxu0 0
        %1321 = vmatpush1.bf16.msra.mxu0 0
        %1322 = vmatprep.subr.bf16.mxu0 0
        %1323 = vmatpush1.bf16.msra.mxu0 0
        %1324 = vmatprep.subr.bf16.mxu0 0
        %1325 = vmatpush1.bf16.msra.mxu0 0
        %1326 = vmatprep.subr.bf16.mxu0 0
        %1327 = vmatpush1.bf16.msra.mxu0 0
        %1328 = vmatprep.subr.bf16.mxu0 0
        %1329 = vmatpush1.bf16.msra.mxu0 0
        %1330 = vmatprep.subr.bf16.mxu0 0
        %1331 = vmatpush1.bf16.msra.mxu0 0
        %1332 = vmatprep.subr.bf16.mxu0 0
        %1333 = vmatpush1.bf16.msra.mxu0 0
        %1334 = vmatprep.subr.bf16.mxu0 %v1318
        %1335 = vmatpush1.bf16.msra.mxu0 %v1315
        %1336 = vmatprep.subr.bf16.mxu0 0
        %1337 = vmatpush2.bf16.msra.mxu0 0
        %1338 = vmatprep.subr.bf16.mxu0 0
        %1339 = vmatpush2.bf16.msra.mxu0 0
        %1340 = vmatprep.subr.bf16.mxu0 0
        %1341 = vmatpush2.bf16.msra.mxu0 0
        %1342 = vmatprep.subr.bf16.mxu0 0
        %1343 = vmatpush2.bf16.msra.mxu0 0
        %1344 = vmatprep.subr.bf16.mxu0 0
        %1345 = vmatpush2.bf16.msra.mxu0 0
        %1346 = vmatprep.subr.bf16.mxu0 0
        %1347 = vmatpush2.bf16.msra.mxu0 0
        %1348 = vmatprep.subr.bf16.mxu0 0
        %1349 = vmatpush2.bf16.msra.mxu0 0
        %1350 = vmatprep.subr.bf16.mxu0 0
        %1351 = vmatpush2.bf16.msra.mxu0 0
        %1352 = vmatprep.mubr.bf16.mxu0 0
        %1353 = vmatmul.mubr.bf16.gmra.mxu0 %v1309
        %v1354 = vpop.f32.mrf.mxu0
        %v1355 = vadd.f32 0.0, %v1354
        %v1356 = vpop.f32.mrf.mxu0
        %v1357 = vadd.f32 0.0, %v1356
        %v1358 = vpop.f32.mrf.mxu0
        %v1359 = vadd.f32 0.0, %v1358
        %v1360 = vpop.f32.mrf.mxu0
        %v1361 = vadd.f32 0.0, %v1360
        %1362 = vmatprep.mubr.bf16.mxu0 0
        %1363 = vmatmul.mubr.bf16.gmra.mxu0 %v1312
        %v1364 = vpop.f32.mrf.mxu0
        %v1365 = vadd.f32 0.0, %v1364
        %v1366 = vpop.f32.mrf.mxu0
        %v1367 = vadd.f32 0.0, %v1366
        %v1368 = vpop.f32.mrf.mxu0
        %v1369 = vadd.f32 0.0, %v1368
        %v1370 = vpop.f32.mrf.mxu0
        %v1371 = vadd.f32 0.0, %v1370
        %1372 = vdwg.mxu0
        %v1373 = vadd.f32 %v1253, %v1355
        %v1374 = vadd.f32 %v1254, %v1357
        %v1375 = vadd.f32 %v1255, %v1359
        %v1376 = vadd.f32 %v1256, %v1361
        %v1377 = vadd.f32 %v1257, %v1365
        %v1378 = vadd.f32 %v1258, %v1367
        %v1379 = vadd.f32 %v1259, %v1369
        %v1380 = vadd.f32 %v1260, %v1371
        %v1381 = vld [vmem:[%s269] sm:$0xff]
        %v1382 = vld [vmem:[%s269 + $0x8] sm:$0xff]
        %v1383 = vld [vmem:[%s269 + $0x10] sm:$0xff]
        %v1384 = vld [vmem:[%s269 + $0x18] sm:$0xff]
        %1386 = vset.pattern.permute.xlu0 0
        %1387 = vperm.xlu0 %1386, %v1381
        %v1388 = vpop.permute.xlu0 %1387
        %1391 = vset.pattern.permute.xlu0 0
        %1392 = vperm.xlu0 %1391, %v1382
        %v1393 = vpop.permute.xlu0 %1392
        %1396 = vset.pattern.permute.xlu0 0
        %1397 = vperm.xlu0 %1396, %v1383
        %v1398 = vpop.permute.xlu0 %1397
        %1401 = vset.pattern.permute.xlu0 0
        %1402 = vperm.xlu0 %1401, %v1384
        %v1403 = vpop.permute.xlu0 %1402
        %v1405 = vadd.f32 %v1373, %v1388
        %v1406 = vadd.f32 %v1374, %v1388
        %v1407 = vadd.f32 %v1375, %v1393
        %v1408 = vadd.f32 %v1376, %v1393
        %v1409 = vadd.f32 %v1377, %v1398
        %v1410 = vadd.f32 %v1378, %v1398
        %v1411 = vadd.f32 %v1379, %v1403
        %v1412 = vadd.f32 %v1380, %v1403
        %v1413 = vxor.u32 %v1405, 2147483648
        %v1414 = vxor.u32 %v1406, 2147483648
        %v1415 = vxor.u32 %v1407, 2147483648
        %v1416 = vxor.u32 %v1408, 2147483648
        %v1417 = vxor.u32 %v1409, 2147483648
        %v1418 = vxor.u32 %v1410, 2147483648
        %v1419 = vxor.u32 %v1411, 2147483648
        %v1420 = vxor.u32 %v1412, 2147483648
        %v1421 = vmul.f32 %v1413, 1.442695
        %v1422 = vpow.pop %v1421
        %v1423 = vmul.f32 %v1414, 1.442695
        %v1424 = vpow.pop %v1423
        %v1425 = vmul.f32 %v1415, 1.442695
        %v1426 = vpow.pop %v1425
        %v1427 = vmul.f32 %v1416, 1.442695
        %v1428 = vpow.pop %v1427
        %v1429 = vmul.f32 %v1417, 1.442695
        %v1430 = vpow.pop %v1429
        %v1431 = vmul.f32 %v1418, 1.442695
        %v1432 = vpow.pop %v1431
        %v1433 = vmul.f32 %v1419, 1.442695
        %v1434 = vpow.pop %v1433
        %v1435 = vmul.f32 %v1420, 1.442695
        %v1436 = vpow.pop %v1435
        %v1437 = vadd.f32 %v1422, 1.0
        %v1438 = vadd.f32 %v1424, 1.0
        %v1439 = vadd.f32 %v1426, 1.0
        %v1440 = vadd.f32 %v1428, 1.0
        %v1441 = vadd.f32 %v1430, 1.0
        %v1442 = vadd.f32 %v1432, 1.0
        %v1443 = vadd.f32 %v1434, 1.0
        %v1444 = vadd.f32 %v1436, 1.0
        %v1445 = vrcp.pop %v1437
        %v1446 = vmul.f32 1.0, %v1445
        %v1447 = vrcp.pop %v1438
        %v1448 = vmul.f32 1.0, %v1447
        %v1449 = vrcp.pop %v1439
        %v1450 = vmul.f32 1.0, %v1449
        %v1451 = vrcp.pop %v1440
        %v1452 = vmul.f32 1.0, %v1451
        %v1453 = vrcp.pop %v1441
        %v1454 = vmul.f32 1.0, %v1453
        %v1455 = vrcp.pop %v1442
        %v1456 = vmul.f32 1.0, %v1455
        %v1457 = vrcp.pop %v1443
        %v1458 = vmul.f32 1.0, %v1457
        %v1459 = vrcp.pop %v1444
        %v1460 = vmul.f32 1.0, %v1459
        %v1461 = vmul.f32 %v1405, %v1446
        %v1462 = vmul.f32 %v1406, %v1448
        %v1463 = vmul.f32 %v1407, %v1450
        %v1464 = vmul.f32 %v1408, %v1452
        %v1465 = vmul.f32 %v1409, %v1454
        %v1466 = vmul.f32 %v1410, %v1456
        %v1467 = vmul.f32 %v1411, %v1458
        %v1468 = vmul.f32 %v1412, %v1460
        %1469 = vst [vmem:[#allocation2] sm:$0xf] 0
        %1470 = vst [vmem:[#allocation2 + $0x10] sm:$0xf] 0
        %1471 = vst [vmem:[#allocation2 + $0x20] sm:$0xf] 0
        %1472 = vst [vmem:[#allocation2 + $0x30] sm:$0xf] 0
        %1473 = vst [vmem:[#allocation2 + $0xc] sm:$0xf] 0
        %1474 = vst [vmem:[#allocation2 + $0x1c] sm:$0xf] 0
        %1475 = vst [vmem:[#allocation2 + $0x2c] sm:$0xf] 0
        %1476 = vst [vmem:[#allocation2 + $0x3c] sm:$0xf] 0
        %v1477 = vpack.c.bf16 %v1463, %v1461
        %v1478 = vpack.c.bf16 %v1464, %v1462
        %v1479 = vpack.c.bf16 %v1467, %v1465
        %v1480 = vpack.c.bf16 %v1468, %v1466
        %v1485 = vunpack.c.l.b16 %v1477
        %v1486 = vunpack.c.l.b16 %v1478
        %v1487 = vunpack.c.h.b16 %v1477
        %v1488 = vunpack.c.h.b16 %v1478
        %v1489 = vunpack.c.l.b16 %v1479
        %v1490 = vunpack.c.l.b16 %v1480
        %v1491 = vunpack.c.h.b16 %v1479
        %v1492 = vunpack.c.h.b16 %v1480
        %v1493 = vpack.c.b16 %v1486, %v1485
        %v1494 = vpack.c.b16 %v1488, %v1487
        %v1495 = vpack.c.b16 %v1490, %v1489
        %v1496 = vpack.c.b16 %v1492, %v1491
        %1501 = vst [vmem:[#allocation2 + $0x4] sm:$0xff] %v1493
        %1502 = vst [vmem:[#allocation2 + $0x14] sm:$0xff] %v1494
        %1503 = vst [vmem:[#allocation2 + $0x24] sm:$0xff] %v1495
        %1504 = vst [vmem:[#allocation2 + $0x34] sm:$0xff] %v1496
        %v1505 = vld [vmem:[#allocation2] sm:$0xff]
        %v1506 = vld [vmem:[#allocation2 + $0x8] sm:$0xf]
        %v1507 = vld [vmem:[#allocation2 + $0x10] sm:$0xff]
        %v1508 = vld [vmem:[#allocation2 + $0x18] sm:$0xf]
        %v1509 = vld [vmem:[#allocation2 + $0x20] sm:$0xff]
        %v1510 = vld [vmem:[#allocation2 + $0x28] sm:$0xf]
        %v1511 = vld [vmem:[#allocation2 + $0x30] sm:$0xff]
        %v1512 = vld [vmem:[#allocation2 + $0x38] sm:$0xf]
        %v1513 = vunpack.c.l.b16 %v302
        %v1514 = vunpack.c.l.b16 %v309
        %v1515 = vpack.c.b16 %v1514, %v1513
        %1516 = vrot.lane.b32.xlu0 %v1515, 111
        %v1517 = vpop.permute.xlu0 %1516
        %v1518 = vrot.slane %v1517, 4
        %v1519 = vsel %vm323, %v1518, %v1517
        %v1522 = vmul.bf16 %v1505, %v1519
        %v1523 = vmul.bf16 %v1506, %v1518
        %v1524 = vmul.bf16 %v1507, %v1519
        %v1525 = vmul.bf16 %v1508, %v1518
        %v1526 = vmul.bf16 %v1509, %v1519
        %v1527 = vmul.bf16 %v1510, %v1518
        %v1528 = vmul.bf16 %v1511, %v1519
        %v1529 = vmul.bf16 %v1512, %v1518
        %v1530 = vld [vmem:[%s4] sm:$0x3]
        %s1531 = scalar_lea.vmem %s4, 2
        %v1532 = vld [vmem:[%s1531] sm:$0x3]
        %v1541 = vunpack.c.l.b16 %v1505
        %v1542 = vunpack.c.h.b16 %v1505
        %v1543 = vunpack.c.l.b16 %v1506
        %v1544 = vunpack.c.l.b16 %v1507
        %v1545 = vunpack.c.h.b16 %v1507
        %v1546 = vunpack.c.l.b16 %v1508
        %v1547 = vunpack.c.l.b16 %v1509
        %v1548 = vunpack.c.h.b16 %v1509
        %v1549 = vunpack.c.l.b16 %v1510
        %v1550 = vunpack.c.l.b16 %v1511
        %v1551 = vunpack.c.h.b16 %v1511
        %v1552 = vunpack.c.l.b16 %v1512
        %v1553 = vpack.c.b16 %v1544, %v1541
        %v1554 = vpack.c.b16 %v1545, %v1542
        %v1555 = vpack.c.b16 %v1546, %v1543
        %v1556 = vpack.c.b16 %v1550, %v1547
        %v1557 = vpack.c.b16 %v1551, %v1548
        %v1558 = vpack.c.b16 %v1552, %v1549
        %1559 = vrot.lane.b32.xlu0 %v1553, 16
        %v1560 = vpop.permute.xlu0 %1559
        %1561 = vrot.lane.b32.xlu0 %v1554, 16
        %v1562 = vpop.permute.xlu0 %1561
        %1563 = vrot.lane.b32.xlu0 %v1555, 16
        %v1564 = vpop.permute.xlu0 %1563
        %1565 = vrot.lane.b32.xlu0 %v1556, 16
        %v1566 = vpop.permute.xlu0 %1565
        %1567 = vrot.lane.b32.xlu0 %v1557, 16
        %v1568 = vpop.permute.xlu0 %1567
        %1569 = vrot.lane.b32.xlu0 %v1558, 16
        %v1570 = vpop.permute.xlu0 %1569
        %v1571 = vsel %vm369, %v1560, %v1562
        %v1572 = vsel %vm369, %v1562, %v1564
        %v1573 = vsel %vm369, %v1566, %v1568
        %v1574 = vsel %vm369, %v1568, %v1570
        %vm1579 = vcmask 261120
        %v1581 = vsel %vm1579, %v1532, 0
        %1583 = vmatprep.subr.bf16.mxu0 0
        %1584 = vmatpush1.bf16.msra.mxu0 0
        %1585 = vmatprep.subr.bf16.mxu0 0
        %1586 = vmatpush1.bf16.msra.mxu0 0
        %1587 = vmatprep.subr.bf16.mxu0 0
        %1588 = vmatpush1.bf16.msra.mxu0 0
        %1589 = vmatprep.subr.bf16.mxu0 0
        %1590 = vmatpush1.bf16.msra.mxu0 0
        %1591 = vmatprep.subr.bf16.mxu0 0
        %1592 = vmatpush1.bf16.msra.mxu0 0
        %1593 = vmatprep.subr.bf16.mxu0 0
        %1594 = vmatpush1.bf16.msra.mxu0 0
        %1595 = vmatprep.subr.bf16.mxu0 %v1574
        %1596 = vmatpush1.bf16.msra.mxu0 %v1573
        %1597 = vmatprep.subr.bf16.mxu0 %v1572
        %1598 = vmatpush1.bf16.msra.mxu0 %v1571
        %1599 = vmatprep.subr.bf16.mxu0 0
        %1600 = vmatpush2.bf16.msra.mxu0 0
        %1601 = vmatprep.subr.bf16.mxu0 0
        %1602 = vmatpush2.bf16.msra.mxu0 0
        %1603 = vmatprep.subr.bf16.mxu0 0
        %1604 = vmatpush2.bf16.msra.mxu0 0
        %1605 = vmatprep.subr.bf16.mxu0 0
        %1606 = vmatpush2.bf16.msra.mxu0 0
        %1607 = vmatprep.subr.bf16.mxu0 0
        %1608 = vmatpush2.bf16.msra.mxu0 0
        %1609 = vmatprep.subr.bf16.mxu0 0
        %1610 = vmatpush2.bf16.msra.mxu0 0
        %1611 = vmatprep.subr.bf16.mxu0 0
        %1612 = vmatpush2.bf16.msra.mxu0 0
        %1613 = vmatprep.subr.bf16.mxu0 0
        %1614 = vmatpush2.bf16.msra.mxu0 0
        %1615 = vmatprep.mubr.bf16.mxu0 0
        %1616 = vmatmul.mubr.bf16.gmra.mxu0 %v1581
        %v1617 = vpop.f32.mrf.mxu0
        %v1618 = vadd.f32 0.0, %v1617
        %v1619 = vpop.f32.mrf.mxu0
        %v1620 = vadd.f32 0.0, %v1619
        %v1621 = vpop.f32.mrf.mxu0
        %v1622 = vpop.f32.mrf.mxu0
        %1623 = vdwg.mxu0
        %v1632 = vunpack.c.l.b16 %v1522
        %v1633 = vunpack.c.h.b16 %v1522
        %v1634 = vunpack.c.l.b16 %v1523
        %v1635 = vunpack.c.l.b16 %v1524
        %v1636 = vunpack.c.h.b16 %v1524
        %v1637 = vunpack.c.l.b16 %v1525
        %v1638 = vunpack.c.l.b16 %v1526
        %v1639 = vunpack.c.h.b16 %v1526
        %v1640 = vunpack.c.l.b16 %v1527
        %v1641 = vunpack.c.l.b16 %v1528
        %v1642 = vunpack.c.h.b16 %v1528
        %v1643 = vunpack.c.l.b16 %v1529
        %v1644 = vpack.c.b16 %v1635, %v1632
        %v1645 = vpack.c.b16 %v1636, %v1633
        %v1646 = vpack.c.b16 %v1637, %v1634
        %v1647 = vpack.c.b16 %v1641, %v1638
        %v1648 = vpack.c.b16 %v1642, %v1639
        %v1649 = vpack.c.b16 %v1643, %v1640
        %1650 = vrot.lane.b32.xlu0 %v1644, 17
        %v1651 = vpop.permute.xlu0 %1650
        %1652 = vrot.lane.b32.xlu0 %v1645, 17
        %v1653 = vpop.permute.xlu0 %1652
        %1654 = vrot.lane.b32.xlu0 %v1646, 17
        %v1655 = vpop.permute.xlu0 %1654
        %1656 = vrot.lane.b32.xlu0 %v1647, 17
        %v1657 = vpop.permute.xlu0 %1656
        %1658 = vrot.lane.b32.xlu0 %v1648, 17
        %v1659 = vpop.permute.xlu0 %1658
        %1660 = vrot.lane.b32.xlu0 %v1649, 17
        %v1661 = vpop.permute.xlu0 %1660
        %v1662 = vsel %vm472, %v1651, %v1653
        %v1663 = vsel %vm472, %v1653, %v1655
        %v1664 = vsel %vm472, %v1657, %v1659
        %v1665 = vsel %vm472, %v1659, %v1661
        %v1671 = vsel %vm1579, %v1530, 0
        %1673 = vmatprep.subr.bf16.mxu0 0
        %1674 = vmatpush1.bf16.msra.mxu0 0
        %1675 = vmatprep.subr.bf16.mxu0 0
        %1676 = vmatpush1.bf16.msra.mxu0 0
        %1677 = vmatprep.subr.bf16.mxu0 0
        %1678 = vmatpush1.bf16.msra.mxu0 0
        %1679 = vmatprep.subr.bf16.mxu0 0
        %1680 = vmatpush1.bf16.msra.mxu0 0
        %1681 = vmatprep.subr.bf16.mxu0 0
        %1682 = vmatpush1.bf16.msra.mxu0 0
        %1683 = vmatprep.subr.bf16.mxu0 0
        %1684 = vmatpush1.bf16.msra.mxu0 0
        %1685 = vmatprep.subr.bf16.mxu0 %v1665
        %1686 = vmatpush1.bf16.msra.mxu0 %v1664
        %1687 = vmatprep.subr.bf16.mxu0 %v1663
        %1688 = vmatpush1.bf16.msra.mxu0 %v1662
        %1689 = vmatprep.subr.bf16.mxu0 0
        %1690 = vmatpush2.bf16.msra.mxu0 0
        %1691 = vmatprep.subr.bf16.mxu0 0
        %1692 = vmatpush2.bf16.msra.mxu0 0
        %1693 = vmatprep.subr.bf16.mxu0 0
        %1694 = vmatpush2.bf16.msra.mxu0 0
        %1695 = vmatprep.subr.bf16.mxu0 0
        %1696 = vmatpush2.bf16.msra.mxu0 0
        %1697 = vmatprep.subr.bf16.mxu0 0
        %1698 = vmatpush2.bf16.msra.mxu0 0
        %1699 = vmatprep.subr.bf16.mxu0 0
        %1700 = vmatpush2.bf16.msra.mxu0 0
        %1701 = vmatprep.subr.bf16.mxu0 0
        %1702 = vmatpush2.bf16.msra.mxu0 0
        %1703 = vmatprep.subr.bf16.mxu0 0
        %1704 = vmatpush2.bf16.msra.mxu0 0
        %1705 = vmatprep.mubr.bf16.mxu0 0
        %1706 = vmatmul.mubr.bf16.gmra.mxu0 %v1671
        %v1707 = vpop.f32.mrf.mxu0
        %v1708 = vadd.f32 %v1618, %v1707
        %v1709 = vpop.f32.mrf.mxu0
        %v1710 = vadd.f32 %v1620, %v1709
        %v1711 = vpop.f32.mrf.mxu0
        %v1712 = vpop.f32.mrf.mxu0
        %1713 = vdwg.mxu0
        %v1714 = vunpack.c.l.b16 %v547
        %v1715 = vunpack.c.l.b16 %v554
        %v1716 = vpack.c.b16 %v1715, %v1714
        %1717 = vrot.lane.b32.xlu0 %v1716, 113
        %v1718 = vpop.permute.xlu0 %1717
        %v1719 = vrot.slane %v1718, 4
        %v1720 = vsel %vm568, %v1719, %v1718
        %v1723 = vmul.bf16 %v1505, %v1720
        %v1724 = vmul.bf16 %v1506, %v1719
        %v1725 = vmul.bf16 %v1507, %v1720
        %v1726 = vmul.bf16 %v1508, %v1719
        %v1727 = vmul.bf16 %v1509, %v1720
        %v1728 = vmul.bf16 %v1510, %v1719
        %v1729 = vmul.bf16 %v1511, %v1720
        %v1730 = vmul.bf16 %v1512, %v1719
        %s1731 = scalar_lea.vmem %s4, 4
        %v1732 = vld [vmem:[%s1731] sm:$0x3]
        %v1741 = vunpack.c.l.b16 %v1723
        %v1742 = vunpack.c.h.b16 %v1723
        %v1743 = vunpack.c.l.b16 %v1724
        %v1744 = vunpack.c.l.b16 %v1725
        %v1745 = vunpack.c.h.b16 %v1725
        %v1746 = vunpack.c.l.b16 %v1726
        %v1747 = vunpack.c.l.b16 %v1727
        %v1748 = vunpack.c.h.b16 %v1727
        %v1749 = vunpack.c.l.b16 %v1728
        %v1750 = vunpack.c.l.b16 %v1729
        %v1751 = vunpack.c.h.b16 %v1729
        %v1752 = vunpack.c.l.b16 %v1730
        %v1753 = vpack.c.b16 %v1744, %v1741
        %v1754 = vpack.c.b16 %v1745, %v1742
        %v1755 = vpack.c.b16 %v1746, %v1743
        %v1756 = vpack.c.b16 %v1750, %v1747
        %v1757 = vpack.c.b16 %v1751, %v1748
        %v1758 = vpack.c.b16 %v1752, %v1749
        %1759 = vrot.lane.b32.xlu0 %v1753, 15
        %v1760 = vpop.permute.xlu0 %1759
        %1761 = vrot.lane.b32.xlu0 %v1754, 15
        %v1762 = vpop.permute.xlu0 %1761
        %1763 = vrot.lane.b32.xlu0 %v1755, 15
        %v1764 = vpop.permute.xlu0 %1763
        %1765 = vrot.lane.b32.xlu0 %v1756, 15
        %v1766 = vpop.permute.xlu0 %1765
        %1767 = vrot.lane.b32.xlu0 %v1757, 15
        %v1768 = vpop.permute.xlu0 %1767
        %1769 = vrot.lane.b32.xlu0 %v1758, 15
        %v1770 = vpop.permute.xlu0 %1769
        %v1771 = vsel %vm610, %v1760, %v1762
        %v1772 = vsel %vm610, %v1762, %v1764
        %v1773 = vsel %vm610, %v1766, %v1768
        %v1774 = vsel %vm610, %v1768, %v1770
        %v1780 = vsel %vm1579, %v1732, 0
        %1782 = vmatprep.subr.bf16.mxu0 0
        %1783 = vmatpush1.bf16.msra.mxu0 0
        %1784 = vmatprep.subr.bf16.mxu0 0
        %1785 = vmatpush1.bf16.msra.mxu0 0
        %1786 = vmatprep.subr.bf16.mxu0 0
        %1787 = vmatpush1.bf16.msra.mxu0 0
        %1788 = vmatprep.subr.bf16.mxu0 0
        %1789 = vmatpush1.bf16.msra.mxu0 0
        %1790 = vmatprep.subr.bf16.mxu0 0
        %1791 = vmatpush1.bf16.msra.mxu0 0
        %1792 = vmatprep.subr.bf16.mxu0 0
        %1793 = vmatpush1.bf16.msra.mxu0 0
        %1794 = vmatprep.subr.bf16.mxu0 %v1774
        %1795 = vmatpush1.bf16.msra.mxu0 %v1773
        %1796 = vmatprep.subr.bf16.mxu0 %v1772
        %1797 = vmatpush1.bf16.msra.mxu0 %v1771
        %1798 = vmatprep.subr.bf16.mxu0 0
        %1799 = vmatpush2.bf16.msra.mxu0 0
        %1800 = vmatprep.subr.bf16.mxu0 0
        %1801 = vmatpush2.bf16.msra.mxu0 0
        %1802 = vmatprep.subr.bf16.mxu0 0
        %1803 = vmatpush2.bf16.msra.mxu0 0
        %1804 = vmatprep.subr.bf16.mxu0 0
        %1805 = vmatpush2.bf16.msra.mxu0 0
        %1806 = vmatprep.subr.bf16.mxu0 0
        %1807 = vmatpush2.bf16.msra.mxu0 0
        %1808 = vmatprep.subr.bf16.mxu0 0
        %1809 = vmatpush2.bf16.msra.mxu0 0
        %1810 = vmatprep.subr.bf16.mxu0 0
        %1811 = vmatpush2.bf16.msra.mxu0 0
        %1812 = vmatprep.subr.bf16.mxu0 0
        %1813 = vmatpush2.bf16.msra.mxu0 0
        %1814 = vmatprep.mubr.bf16.mxu0 0
        %1815 = vmatmul.mubr.bf16.gmra.mxu0 %v1780
        %v1816 = vpop.f32.mrf.mxu0
        %v1817 = vadd.f32 0.0, %v1816
        %v1818 = vpop.f32.mrf.mxu0
        %v1819 = vadd.f32 0.0, %v1818
        %v1820 = vpop.f32.mrf.mxu0
        %v1821 = vpop.f32.mrf.mxu0
        %1822 = vdwg.mxu0
        %v1823 = vadd.f32 %v1708, %v1817
        %v1824 = vadd.f32 %v1710, %v1819
        %v1825 = vld [vmem:[#allocation2] sm:$0xff]
        %v1826 = vld [vmem:[#allocation2 + $0x8] sm:$0xf]
        %v1827 = vld [vmem:[#allocation2 + $0x10] sm:$0xff]
        %v1828 = vld [vmem:[#allocation2 + $0x18] sm:$0xf]
        %v1829 = vld [vmem:[#allocation2 + $0x20] sm:$0xff]
        %v1830 = vld [vmem:[#allocation2 + $0x28] sm:$0xf]
        %v1831 = vld [vmem:[#allocation2 + $0x30] sm:$0xff]
        %v1832 = vld [vmem:[#allocation2 + $0x38] sm:$0xf]
        %1833 = vrot.lane.b32.xlu0 %v1515, 127
        %v1834 = vpop.permute.xlu0 %1833
        %v1835 = vrot.slane %v1834, 4
        %v1836 = vsel %vm690, %v1835, %v1834
        %v1839 = vmul.bf16 %v1825, %v1836
        %v1840 = vmul.bf16 %v1826, %v1835
        %v1841 = vmul.bf16 %v1827, %v1836
        %v1842 = vmul.bf16 %v1828, %v1835
        %v1843 = vmul.bf16 %v1829, %v1836
        %v1844 = vmul.bf16 %v1830, %v1835
        %v1845 = vmul.bf16 %v1831, %v1836
        %v1846 = vmul.bf16 %v1832, %v1835
        %s1847 = scalar_lea.vmem %s4, 6
        %v1848 = vld [vmem:[%s1847] sm:$0x3]
        %v1857 = vunpack.c.l.b16 %v1839
        %v1858 = vunpack.c.h.b16 %v1839
        %v1859 = vunpack.c.l.b16 %v1840
        %v1860 = vunpack.c.l.b16 %v1841
        %v1861 = vunpack.c.h.b16 %v1841
        %v1862 = vunpack.c.l.b16 %v1842
        %v1863 = vunpack.c.l.b16 %v1843
        %v1864 = vunpack.c.h.b16 %v1843
        %v1865 = vunpack.c.l.b16 %v1844
        %v1866 = vunpack.c.l.b16 %v1845
        %v1867 = vunpack.c.h.b16 %v1845
        %v1868 = vunpack.c.l.b16 %v1846
        %v1869 = vpack.c.b16 %v1860, %v1857
        %v1870 = vpack.c.b16 %v1861, %v1858
        %v1871 = vpack.c.b16 %v1862, %v1859
        %v1872 = vpack.c.b16 %v1866, %v1863
        %v1873 = vpack.c.b16 %v1867, %v1864
        %v1874 = vpack.c.b16 %v1868, %v1865
        %1875 = vrot.lane.b32.xlu0 %v1869, 1
        %v1876 = vpop.permute.xlu0 %1875
        %1877 = vrot.lane.b32.xlu0 %v1870, 1
        %v1878 = vpop.permute.xlu0 %1877
        %1879 = vrot.lane.b32.xlu0 %v1871, 1
        %v1880 = vpop.permute.xlu0 %1879
        %1881 = vrot.lane.b32.xlu0 %v1872, 1
        %v1882 = vpop.permute.xlu0 %1881
        %1883 = vrot.lane.b32.xlu0 %v1873, 1
        %v1884 = vpop.permute.xlu0 %1883
        %1885 = vrot.lane.b32.xlu0 %v1874, 1
        %v1886 = vpop.permute.xlu0 %1885
        %v1887 = vsel %vm732, %v1876, %v1878
        %v1888 = vsel %vm732, %v1878, %v1880
        %v1889 = vsel %vm732, %v1882, %v1884
        %v1890 = vsel %vm732, %v1884, %v1886
        %v1896 = vsel %vm1579, %v1848, 0
        %1898 = vmatprep.subr.bf16.mxu0 0
        %1899 = vmatpush1.bf16.msra.mxu0 0
        %1900 = vmatprep.subr.bf16.mxu0 0
        %1901 = vmatpush1.bf16.msra.mxu0 0
        %1902 = vmatprep.subr.bf16.mxu0 0
        %1903 = vmatpush1.bf16.msra.mxu0 0
        %1904 = vmatprep.subr.bf16.mxu0 0
        %1905 = vmatpush1.bf16.msra.mxu0 0
        %1906 = vmatprep.subr.bf16.mxu0 0
        %1907 = vmatpush1.bf16.msra.mxu0 0
        %1908 = vmatprep.subr.bf16.mxu0 0
        %1909 = vmatpush1.bf16.msra.mxu0 0
        %1910 = vmatprep.subr.bf16.mxu0 %v1890
        %1911 = vmatpush1.bf16.msra.mxu0 %v1889
        %1912 = vmatprep.subr.bf16.mxu0 %v1888
        %1913 = vmatpush1.bf16.msra.mxu0 %v1887
        %1914 = vmatprep.subr.bf16.mxu0 0
        %1915 = vmatpush2.bf16.msra.mxu0 0
        %1916 = vmatprep.subr.bf16.mxu0 0
        %1917 = vmatpush2.bf16.msra.mxu0 0
        %1918 = vmatprep.subr.bf16.mxu0 0
        %1919 = vmatpush2.bf16.msra.mxu0 0
        %1920 = vmatprep.subr.bf16.mxu0 0
        %1921 = vmatpush2.bf16.msra.mxu0 0
        %1922 = vmatprep.subr.bf16.mxu0 0
        %1923 = vmatpush2.bf16.msra.mxu0 0
        %1924 = vmatprep.subr.bf16.mxu0 0
        %1925 = vmatpush2.bf16.msra.mxu0 0
        %1926 = vmatprep.subr.bf16.mxu0 0
        %1927 = vmatpush2.bf16.msra.mxu0 0
        %1928 = vmatprep.subr.bf16.mxu0 0
        %1929 = vmatpush2.bf16.msra.mxu0 0
        %1930 = vmatprep.mubr.bf16.mxu0 0
        %1931 = vmatmul.mubr.bf16.gmra.mxu0 %v1896
        %v1932 = vpop.f32.mrf.mxu0
        %v1933 = vadd.f32 0.0, %v1932
        %v1934 = vpop.f32.mrf.mxu0
        %v1935 = vadd.f32 0.0, %v1934
        %v1936 = vpop.f32.mrf.mxu0
        %v1937 = vpop.f32.mrf.mxu0
        %1938 = vdwg.mxu0
        %v1939 = vadd.f32 %v1823, %v1933
        %v1940 = vadd.f32 %v1824, %v1935
        %v1941 = vld [vmem:[#allocation2 + $0x4] sm:$0xff]
        %v1942 = vld [vmem:[#allocation2 + $0x14] sm:$0xff]
        %v1943 = vld [vmem:[#allocation2 + $0x24] sm:$0xff]
        %v1944 = vld [vmem:[#allocation2 + $0x34] sm:$0xff]
        %s1945 = scalar_lea.vmem %s4, 8
        %v1946 = vld [vmem:[%s1945] sm:$0x3]
        %v1951 = vunpack.c.l.b16 %v1941
        %v1952 = vunpack.c.h.b16 %v1941
        %v1953 = vunpack.c.l.b16 %v1942
        %v1954 = vunpack.c.h.b16 %v1942
        %v1955 = vunpack.c.l.b16 %v1943
        %v1956 = vunpack.c.h.b16 %v1943
        %v1957 = vunpack.c.l.b16 %v1944
        %v1958 = vunpack.c.h.b16 %v1944
        %v1959 = vpack.c.b16 %v1953, %v1951
        %v1960 = vpack.c.b16 %v1954, %v1952
        %v1961 = vpack.c.b16 %v1957, %v1955
        %v1962 = vpack.c.b16 %v1958, %v1956
        %v1968 = vsel %vm1579, %v1946, 0
        %1970 = vmatprep.subr.bf16.mxu0 0
        %1971 = vmatpush1.bf16.msra.mxu0 0
        %1972 = vmatprep.subr.bf16.mxu0 0
        %1973 = vmatpush1.bf16.msra.mxu0 0
        %1974 = vmatprep.subr.bf16.mxu0 0
        %1975 = vmatpush1.bf16.msra.mxu0 0
        %1976 = vmatprep.subr.bf16.mxu0 0
        %1977 = vmatpush1.bf16.msra.mxu0 0
        %1978 = vmatprep.subr.bf16.mxu0 0
        %1979 = vmatpush1.bf16.msra.mxu0 0
        %1980 = vmatprep.subr.bf16.mxu0 0
        %1981 = vmatpush1.bf16.msra.mxu0 0
        %1982 = vmatprep.subr.bf16.mxu0 %v1962
        %1983 = vmatpush1.bf16.msra.mxu0 %v1961
        %1984 = vmatprep.subr.bf16.mxu0 %v1960
        %1985 = vmatpush1.bf16.msra.mxu0 %v1959
        %1986 = vmatprep.subr.bf16.mxu0 0
        %1987 = vmatpush2.bf16.msra.mxu0 0
        %1988 = vmatprep.subr.bf16.mxu0 0
        %1989 = vmatpush2.bf16.msra.mxu0 0
        %1990 = vmatprep.subr.bf16.mxu0 0
        %1991 = vmatpush2.bf16.msra.mxu0 0
        %1992 = vmatprep.subr.bf16.mxu0 0
        %1993 = vmatpush2.bf16.msra.mxu0 0
        %1994 = vmatprep.subr.bf16.mxu0 0
        %1995 = vmatpush2.bf16.msra.mxu0 0
        %1996 = vmatprep.subr.bf16.mxu0 0
        %1997 = vmatpush2.bf16.msra.mxu0 0
        %1998 = vmatprep.subr.bf16.mxu0 0
        %1999 = vmatpush2.bf16.msra.mxu0 0
        %2000 = vmatprep.subr.bf16.mxu0 0
        %2001 = vmatpush2.bf16.msra.mxu0 0
        %2002 = vmatprep.mubr.bf16.mxu0 0
        %2003 = vmatmul.mubr.bf16.gmra.mxu0 %v1968
        %v2004 = vpop.f32.mrf.mxu0
        %v2005 = vadd.f32 0.0, %v2004
        %v2006 = vpop.f32.mrf.mxu0
        %v2007 = vadd.f32 0.0, %v2006
        %v2008 = vpop.f32.mrf.mxu0
        %v2009 = vpop.f32.mrf.mxu0
        %2010 = vdwg.mxu0
        %v2011 = vadd.f32 %v1939, %v2005
        %v2012 = vadd.f32 %v1940, %v2007
        %v2013 = vld [vmem:[#allocation2 + $0x4] sm:$0xff]
        %v2014 = vld [vmem:[#allocation2 + $0xc] sm:$0xf]
        %v2015 = vld [vmem:[#allocation2 + $0x14] sm:$0xff]
        %v2016 = vld [vmem:[#allocation2 + $0x1c] sm:$0xf]
        %v2017 = vld [vmem:[#allocation2 + $0x24] sm:$0xff]
        %v2018 = vld [vmem:[#allocation2 + $0x2c] sm:$0xf]
        %v2019 = vld [vmem:[#allocation2 + $0x34] sm:$0xff]
        %v2020 = vld [vmem:[#allocation2 + $0x3c] sm:$0xf]
        %2021 = vrot.lane.b32.xlu0 %v1716, 1
        %v2022 = vpop.permute.xlu0 %2021
        %v2023 = vrot.slane %v2022, 4
        %v2024 = vsel %vm732, %v2023, %v2022
        %v2027 = vmul.bf16 %v2013, %v2024
        %v2028 = vmul.bf16 %v2014, %v2023
        %v2029 = vmul.bf16 %v2015, %v2024
        %v2030 = vmul.bf16 %v2016, %v2023
        %v2031 = vmul.bf16 %v2017, %v2024
        %v2032 = vmul.bf16 %v2018, %v2023
        %v2033 = vmul.bf16 %v2019, %v2024
        %v2034 = vmul.bf16 %v2020, %v2023
        %s2035 = scalar_lea.vmem %s4, 10
        %v2036 = vld [vmem:[%s2035] sm:$0x3]
        %v2045 = vunpack.c.l.b16 %v2027
        %v2046 = vunpack.c.h.b16 %v2027
        %v2047 = vunpack.c.l.b16 %v2028
        %v2048 = vunpack.c.l.b16 %v2029
        %v2049 = vunpack.c.h.b16 %v2029
        %v2050 = vunpack.c.l.b16 %v2030
        %v2051 = vunpack.c.l.b16 %v2031
        %v2052 = vunpack.c.h.b16 %v2031
        %v2053 = vunpack.c.l.b16 %v2032
        %v2054 = vunpack.c.l.b16 %v2033
        %v2055 = vunpack.c.h.b16 %v2033
        %v2056 = vunpack.c.l.b16 %v2034
        %v2057 = vpack.c.b16 %v2048, %v2045
        %v2058 = vpack.c.b16 %v2049, %v2046
        %v2059 = vpack.c.b16 %v2050, %v2047
        %v2060 = vpack.c.b16 %v2054, %v2051
        %v2061 = vpack.c.b16 %v2055, %v2052
        %v2062 = vpack.c.b16 %v2056, %v2053
        %2063 = vrot.lane.b32.xlu0 %v2057, 127
        %v2064 = vpop.permute.xlu0 %2063
        %2065 = vrot.lane.b32.xlu0 %v2058, 127
        %v2066 = vpop.permute.xlu0 %2065
        %2067 = vrot.lane.b32.xlu0 %v2059, 127
        %v2068 = vpop.permute.xlu0 %2067
        %2069 = vrot.lane.b32.xlu0 %v2060, 127
        %v2070 = vpop.permute.xlu0 %2069
        %2071 = vrot.lane.b32.xlu0 %v2061, 127
        %v2072 = vpop.permute.xlu0 %2071
        %2073 = vrot.lane.b32.xlu0 %v2062, 127
        %v2074 = vpop.permute.xlu0 %2073
        %v2075 = vsel %vm690, %v2064, %v2066
        %v2076 = vsel %vm690, %v2066, %v2068
        %v2077 = vsel %vm690, %v2070, %v2072
        %v2078 = vsel %vm690, %v2072, %v2074
        %v2084 = vsel %vm1579, %v2036, 0
        %2086 = vmatprep.subr.bf16.mxu0 0
        %2087 = vmatpush1.bf16.msra.mxu0 0
        %2088 = vmatprep.subr.bf16.mxu0 0
        %2089 = vmatpush1.bf16.msra.mxu0 0
        %2090 = vmatprep.subr.bf16.mxu0 0
        %2091 = vmatpush1.bf16.msra.mxu0 0
        %2092 = vmatprep.subr.bf16.mxu0 0
        %2093 = vmatpush1.bf16.msra.mxu0 0
        %2094 = vmatprep.subr.bf16.mxu0 0
        %2095 = vmatpush1.bf16.msra.mxu0 0
        %2096 = vmatprep.subr.bf16.mxu0 0
        %2097 = vmatpush1.bf16.msra.mxu0 0
        %2098 = vmatprep.subr.bf16.mxu0 %v2078
        %2099 = vmatpush1.bf16.msra.mxu0 %v2077
        %2100 = vmatprep.subr.bf16.mxu0 %v2076
        %2101 = vmatpush1.bf16.msra.mxu0 %v2075
        %2102 = vmatprep.subr.bf16.mxu0 0
        %2103 = vmatpush2.bf16.msra.mxu0 0
        %2104 = vmatprep.subr.bf16.mxu0 0
        %2105 = vmatpush2.bf16.msra.mxu0 0
        %2106 = vmatprep.subr.bf16.mxu0 0
        %2107 = vmatpush2.bf16.msra.mxu0 0
        %2108 = vmatprep.subr.bf16.mxu0 0
        %2109 = vmatpush2.bf16.msra.mxu0 0
        %2110 = vmatprep.subr.bf16.mxu0 0
        %2111 = vmatpush2.bf16.msra.mxu0 0
        %2112 = vmatprep.subr.bf16.mxu0 0
        %2113 = vmatpush2.bf16.msra.mxu0 0
        %2114 = vmatprep.subr.bf16.mxu0 0
        %2115 = vmatpush2.bf16.msra.mxu0 0
        %2116 = vmatprep.subr.bf16.mxu0 0
        %2117 = vmatpush2.bf16.msra.mxu0 0
        %2118 = vmatprep.mubr.bf16.mxu0 0
        %2119 = vmatmul.mubr.bf16.gmra.mxu0 %v2084
        %v2120 = vpop.f32.mrf.mxu0
        %v2121 = vadd.f32 0.0, %v2120
        %v2122 = vpop.f32.mrf.mxu0
        %v2123 = vadd.f32 0.0, %v2122
        %v2124 = vpop.f32.mrf.mxu0
        %v2125 = vpop.f32.mrf.mxu0
        %2126 = vdwg.mxu0
        %v2127 = vadd.f32 %v2011, %v2121
        %v2128 = vadd.f32 %v2012, %v2123
        %2129 = vrot.lane.b32.xlu0 %v1515, 15
        %v2130 = vpop.permute.xlu0 %2129
        %v2131 = vrot.slane %v2130, 4
        %v2132 = vsel %vm610, %v2131, %v2130
        %v2135 = vmul.bf16 %v2013, %v2132
        %v2136 = vmul.bf16 %v2014, %v2131
        %v2137 = vmul.bf16 %v2015, %v2132
        %v2138 = vmul.bf16 %v2016, %v2131
        %v2139 = vmul.bf16 %v2017, %v2132
        %v2140 = vmul.bf16 %v2018, %v2131
        %v2141 = vmul.bf16 %v2019, %v2132
        %v2142 = vmul.bf16 %v2020, %v2131
        %s2143 = scalar_lea.vmem %s4, 12
        %v2144 = vld [vmem:[%s2143] sm:$0x3]
        %v2153 = vunpack.c.l.b16 %v2135
        %v2154 = vunpack.c.h.b16 %v2135
        %v2155 = vunpack.c.l.b16 %v2136
        %v2156 = vunpack.c.l.b16 %v2137
        %v2157 = vunpack.c.h.b16 %v2137
        %v2158 = vunpack.c.l.b16 %v2138
        %v2159 = vunpack.c.l.b16 %v2139
        %v2160 = vunpack.c.h.b16 %v2139
        %v2161 = vunpack.c.l.b16 %v2140
        %v2162 = vunpack.c.l.b16 %v2141
        %v2163 = vunpack.c.h.b16 %v2141
        %v2164 = vunpack.c.l.b16 %v2142
        %v2165 = vpack.c.b16 %v2156, %v2153
        %v2166 = vpack.c.b16 %v2157, %v2154
        %v2167 = vpack.c.b16 %v2158, %v2155
        %v2168 = vpack.c.b16 %v2162, %v2159
        %v2169 = vpack.c.b16 %v2163, %v2160
        %v2170 = vpack.c.b16 %v2164, %v2161
        %2171 = vrot.lane.b32.xlu0 %v2165, 113
        %v2172 = vpop.permute.xlu0 %2171
        %2173 = vrot.lane.b32.xlu0 %v2166, 113
        %v2174 = vpop.permute.xlu0 %2173
        %2175 = vrot.lane.b32.xlu0 %v2167, 113
        %v2176 = vpop.permute.xlu0 %2175
        %2177 = vrot.lane.b32.xlu0 %v2168, 113
        %v2178 = vpop.permute.xlu0 %2177
        %2179 = vrot.lane.b32.xlu0 %v2169, 113
        %v2180 = vpop.permute.xlu0 %2179
        %2181 = vrot.lane.b32.xlu0 %v2170, 113
        %v2182 = vpop.permute.xlu0 %2181
        %v2183 = vsel %vm568, %v2172, %v2174
        %v2184 = vsel %vm568, %v2174, %v2176
        %v2185 = vsel %vm568, %v2178, %v2180
        %v2186 = vsel %vm568, %v2180, %v2182
        %v2192 = vsel %vm1579, %v2144, 0
        %2194 = vmatprep.subr.bf16.mxu0 0
        %2195 = vmatpush1.bf16.msra.mxu0 0
        %2196 = vmatprep.subr.bf16.mxu0 0
        %2197 = vmatpush1.bf16.msra.mxu0 0
        %2198 = vmatprep.subr.bf16.mxu0 0
        %2199 = vmatpush1.bf16.msra.mxu0 0
        %2200 = vmatprep.subr.bf16.mxu0 0
        %2201 = vmatpush1.bf16.msra.mxu0 0
        %2202 = vmatprep.subr.bf16.mxu0 0
        %2203 = vmatpush1.bf16.msra.mxu0 0
        %2204 = vmatprep.subr.bf16.mxu0 0
        %2205 = vmatpush1.bf16.msra.mxu0 0
        %2206 = vmatprep.subr.bf16.mxu0 %v2186
        %2207 = vmatpush1.bf16.msra.mxu0 %v2185
        %2208 = vmatprep.subr.bf16.mxu0 %v2184
        %2209 = vmatpush1.bf16.msra.mxu0 %v2183
        %2210 = vmatprep.subr.bf16.mxu0 0
        %2211 = vmatpush2.bf16.msra.mxu0 0
        %2212 = vmatprep.subr.bf16.mxu0 0
        %2213 = vmatpush2.bf16.msra.mxu0 0
        %2214 = vmatprep.subr.bf16.mxu0 0
        %2215 = vmatpush2.bf16.msra.mxu0 0
        %2216 = vmatprep.subr.bf16.mxu0 0
        %2217 = vmatpush2.bf16.msra.mxu0 0
        %2218 = vmatprep.subr.bf16.mxu0 0
        %2219 = vmatpush2.bf16.msra.mxu0 0
        %2220 = vmatprep.subr.bf16.mxu0 0
        %2221 = vmatpush2.bf16.msra.mxu0 0
        %2222 = vmatprep.subr.bf16.mxu0 0
        %2223 = vmatpush2.bf16.msra.mxu0 0
        %2224 = vmatprep.subr.bf16.mxu0 0
        %2225 = vmatpush2.bf16.msra.mxu0 0
        %2226 = vmatprep.mubr.bf16.mxu0 0
        %2227 = vmatmul.mubr.bf16.gmra.mxu0 %v2192
        %v2228 = vpop.f32.mrf.mxu0
        %v2229 = vadd.f32 0.0, %v2228
        %v2230 = vpop.f32.mrf.mxu0
        %v2231 = vadd.f32 0.0, %v2230
        %v2232 = vpop.f32.mrf.mxu0
        %v2233 = vpop.f32.mrf.mxu0
        %2234 = vdwg.mxu0
        %v2235 = vadd.f32 %v2127, %v2229
        %v2236 = vadd.f32 %v2128, %v2231
        %s2237 = scalar_lea.vmem %s4, 14
        %v2238 = vld [vmem:[%s2237] sm:$0x3]
        %v2247 = vunpack.c.l.b16 %v2013
        %v2248 = vunpack.c.h.b16 %v2013
        %v2249 = vunpack.c.l.b16 %v2014
        %v2250 = vunpack.c.l.b16 %v2015
        %v2251 = vunpack.c.h.b16 %v2015
        %v2252 = vunpack.c.l.b16 %v2016
        %v2253 = vunpack.c.l.b16 %v2017
        %v2254 = vunpack.c.h.b16 %v2017
        %v2255 = vunpack.c.l.b16 %v2018
        %v2256 = vunpack.c.l.b16 %v2019
        %v2257 = vunpack.c.h.b16 %v2019
        %v2258 = vunpack.c.l.b16 %v2020
        %v2259 = vpack.c.b16 %v2250, %v2247
        %v2260 = vpack.c.b16 %v2251, %v2248
        %v2261 = vpack.c.b16 %v2252, %v2249
        %v2262 = vpack.c.b16 %v2256, %v2253
        %v2263 = vpack.c.b16 %v2257, %v2254
        %v2264 = vpack.c.b16 %v2258, %v2255
        %2265 = vrot.lane.b32.xlu0 %v2259, 112
        %v2266 = vpop.permute.xlu0 %2265
        %2267 = vrot.lane.b32.xlu0 %v2260, 112
        %v2268 = vpop.permute.xlu0 %2267
        %2269 = vrot.lane.b32.xlu0 %v2261, 112
        %v2270 = vpop.permute.xlu0 %2269
        %2271 = vrot.lane.b32.xlu0 %v2262, 112
        %v2272 = vpop.permute.xlu0 %2271
        %2273 = vrot.lane.b32.xlu0 %v2263, 112
        %v2274 = vpop.permute.xlu0 %2273
        %2275 = vrot.lane.b32.xlu0 %v2264, 112
        %v2276 = vpop.permute.xlu0 %2275
        %v2277 = vsel %vm1185, %v2266, %v2268
        %v2278 = vsel %vm1185, %v2268, %v2270
        %v2279 = vsel %vm1185, %v2272, %v2274
        %v2280 = vsel %vm1185, %v2274, %v2276
        %v2286 = vsel %vm1579, %v2238, 0
        %2288 = vmatprep.subr.bf16.mxu0 0
        %2289 = vmatpush1.bf16.msra.mxu0 0
        %2290 = vmatprep.subr.bf16.mxu0 0
        %2291 = vmatpush1.bf16.msra.mxu0 0
        %2292 = vmatprep.subr.bf16.mxu0 0
        %2293 = vmatpush1.bf16.msra.mxu0 0
        %2294 = vmatprep.subr.bf16.mxu0 0
        %2295 = vmatpush1.bf16.msra.mxu0 0
        %2296 = vmatprep.subr.bf16.mxu0 0
        %2297 = vmatpush1.bf16.msra.mxu0 0
        %2298 = vmatprep.subr.bf16.mxu0 0
        %2299 = vmatpush1.bf16.msra.mxu0 0
        %2300 = vmatprep.subr.bf16.mxu0 %v2280
        %2301 = vmatpush1.bf16.msra.mxu0 %v2279
        %2302 = vmatprep.subr.bf16.mxu0 %v2278
        %2303 = vmatpush1.bf16.msra.mxu0 %v2277
        %2304 = vmatprep.subr.bf16.mxu0 0
        %2305 = vmatpush2.bf16.msra.mxu0 0
        %2306 = vmatprep.subr.bf16.mxu0 0
        %2307 = vmatpush2.bf16.msra.mxu0 0
        %2308 = vmatprep.subr.bf16.mxu0 0
        %2309 = vmatpush2.bf16.msra.mxu0 0
        %2310 = vmatprep.subr.bf16.mxu0 0
        %2311 = vmatpush2.bf16.msra.mxu0 0
        %2312 = vmatprep.subr.bf16.mxu0 0
        %2313 = vmatpush2.bf16.msra.mxu0 0
        %2314 = vmatprep.subr.bf16.mxu0 0
        %2315 = vmatpush2.bf16.msra.mxu0 0
        %2316 = vmatprep.subr.bf16.mxu0 0
        %2317 = vmatpush2.bf16.msra.mxu0 0
        %2318 = vmatprep.subr.bf16.mxu0 0
        %2319 = vmatpush2.bf16.msra.mxu0 0
        %2320 = vmatprep.mubr.bf16.mxu0 0
        %2321 = vmatmul.mubr.bf16.gmra.mxu0 %v2286
        %v2322 = vpop.f32.mrf.mxu0
        %v2323 = vadd.f32 0.0, %v2322
        %v2324 = vpop.f32.mrf.mxu0
        %v2325 = vadd.f32 0.0, %v2324
        %v2326 = vpop.f32.mrf.mxu0
        %v2327 = vpop.f32.mrf.mxu0
        %2328 = vdwg.mxu0
        %v2329 = vadd.f32 %v2235, %v2323
        %v2330 = vadd.f32 %v2236, %v2325
        %2331 = vrot.lane.b32.xlu0 %v1716, 17
        %v2332 = vpop.permute.xlu0 %2331
        %v2333 = vrot.slane %v2332, 4
        %v2334 = vsel %vm472, %v2333, %v2332
        %v2337 = vmul.bf16 %v2013, %v2334
        %v2338 = vmul.bf16 %v2014, %v2333
        %v2339 = vmul.bf16 %v2015, %v2334
        %v2340 = vmul.bf16 %v2016, %v2333
        %v2341 = vmul.bf16 %v2017, %v2334
        %v2342 = vmul.bf16 %v2018, %v2333
        %v2343 = vmul.bf16 %v2019, %v2334
        %v2344 = vmul.bf16 %v2020, %v2333
        %s2345 = scalar_lea.vmem %s4, 16
        %v2346 = vld [vmem:[%s2345] sm:$0x3]
        %v2355 = vunpack.c.l.b16 %v2337
        %v2356 = vunpack.c.h.b16 %v2337
        %v2357 = vunpack.c.l.b16 %v2338
        %v2358 = vunpack.c.l.b16 %v2339
        %v2359 = vunpack.c.h.b16 %v2339
        %v2360 = vunpack.c.l.b16 %v2340
        %v2361 = vunpack.c.l.b16 %v2341
        %v2362 = vunpack.c.h.b16 %v2341
        %v2363 = vunpack.c.l.b16 %v2342
        %v2364 = vunpack.c.l.b16 %v2343
        %v2365 = vunpack.c.h.b16 %v2343
        %v2366 = vunpack.c.l.b16 %v2344
        %v2367 = vpack.c.b16 %v2358, %v2355
        %v2368 = vpack.c.b16 %v2359, %v2356
        %v2369 = vpack.c.b16 %v2360, %v2357
        %v2370 = vpack.c.b16 %v2364, %v2361
        %v2371 = vpack.c.b16 %v2365, %v2362
        %v2372 = vpack.c.b16 %v2366, %v2363
        %2373 = vrot.lane.b32.xlu0 %v2367, 111
        %v2374 = vpop.permute.xlu0 %2373
        %2375 = vrot.lane.b32.xlu0 %v2368, 111
        %v2376 = vpop.permute.xlu0 %2375
        %2377 = vrot.lane.b32.xlu0 %v2369, 111
        %v2378 = vpop.permute.xlu0 %2377
        %2379 = vrot.lane.b32.xlu0 %v2370, 111
        %v2380 = vpop.permute.xlu0 %2379
        %2381 = vrot.lane.b32.xlu0 %v2371, 111
        %v2382 = vpop.permute.xlu0 %2381
        %2383 = vrot.lane.b32.xlu0 %v2372, 111
        %v2384 = vpop.permute.xlu0 %2383
        %v2385 = vsel %vm323, %v2374, %v2376
        %v2386 = vsel %vm323, %v2376, %v2378
        %v2387 = vsel %vm323, %v2380, %v2382
        %v2388 = vsel %vm323, %v2382, %v2384
        %v2394 = vsel %vm1579, %v2346, 0
        %2396 = vmatprep.subr.bf16.mxu0 0
        %2397 = vmatpush1.bf16.msra.mxu0 0
        %2398 = vmatprep.subr.bf16.mxu0 0
        %2399 = vmatpush1.bf16.msra.mxu0 0
        %2400 = vmatprep.subr.bf16.mxu0 0
        %2401 = vmatpush1.bf16.msra.mxu0 0
        %2402 = vmatprep.subr.bf16.mxu0 0
        %2403 = vmatpush1.bf16.msra.mxu0 0
        %2404 = vmatprep.subr.bf16.mxu0 0
        %2405 = vmatpush1.bf16.msra.mxu0 0
        %2406 = vmatprep.subr.bf16.mxu0 0
        %2407 = vmatpush1.bf16.msra.mxu0 0
        %2408 = vmatprep.subr.bf16.mxu0 %v2388
        %2409 = vmatpush1.bf16.msra.mxu0 %v2387
        %2410 = vmatprep.subr.bf16.mxu0 %v2386
        %2411 = vmatpush1.bf16.msra.mxu0 %v2385
        %2412 = vmatprep.subr.bf16.mxu0 0
        %2413 = vmatpush2.bf16.msra.mxu0 0
        %2414 = vmatprep.subr.bf16.mxu0 0
        %2415 = vmatpush2.bf16.msra.mxu0 0
        %2416 = vmatprep.subr.bf16.mxu0 0
        %2417 = vmatpush2.bf16.msra.mxu0 0
        %2418 = vmatprep.subr.bf16.mxu0 0
        %2419 = vmatpush2.bf16.msra.mxu0 0
        %2420 = vmatprep.subr.bf16.mxu0 0
        %2421 = vmatpush2.bf16.msra.mxu0 0
        %2422 = vmatprep.subr.bf16.mxu0 0
        %2423 = vmatpush2.bf16.msra.mxu0 0
        %2424 = vmatprep.subr.bf16.mxu0 0
        %2425 = vmatpush2.bf16.msra.mxu0 0
        %2426 = vmatprep.subr.bf16.mxu0 0
        %2427 = vmatpush2.bf16.msra.mxu0 0
        %2428 = vmatprep.mubr.bf16.mxu0 0
        %2429 = vmatmul.mubr.bf16.gmra.mxu0 %v2394
        %v2430 = vpop.f32.mrf.mxu0
        %v2431 = vadd.f32 0.0, %v2430
        %v2432 = vpop.f32.mrf.mxu0
        %v2433 = vadd.f32 0.0, %v2432
        %v2434 = vpop.f32.mrf.mxu0
        %v2435 = vpop.f32.mrf.mxu0
        %2436 = vdwg.mxu0
        %v2437 = vadd.f32 %v2329, %v2431
        %v2438 = vadd.f32 %v2330, %v2433
        %v2439 = vld [vmem:[%s5] sm:$0xf]
        %2441 = vset.pattern.permute.xlu0 0
        %2442 = vperm.xlu0 %2441, %v2439
        %v2443 = vpop.permute.xlu0 %2442
        %v2445 = vadd.f32 %v2437, %v2443
        %v2446 = vadd.f32 %v2438, %v2443
        %v2449 = vcombine.low %v2445, %v2446
        %2451 = vst [vmem:[%s259] sm:$0xff] %v2449
        %s2452 = sand.u32 %s164, 1
        %s2453 = scalar_lea.sflag [#allocation4], %s2452
        %s2454 = sand.u32 %s164, 1
        %s2455 = smul.addr %s2454, 8
        %s2456 = scalar_lea.vmem [#allocation3], %s2455
        // Predicated region
        $region45: #{tpu_custom_call.1} parent=43 // pred_check
          %p2457 = pneg %p174
        $region46: #{tpu_custom_call.1} parent=43 // pred_check_branch
          %2459 = sbr.rel (%p2457) target = $region48
        $region47: #{tpu_custom_call.1} parent=43 // pred_region
          %s2461 = ssub.s32 128, 128
          %2462 = vsyncadd %s2453, %s2461
          %s2463 = smul.addr %s20, 2
          %s2464 = smul.addr %s2463, 64
          %s2465 = scalar_lea.hbm %s6, %s2464
          %s2467 = sshll.u32 %s2456, 4
          %s2468 = int_to_ptr.vmem [resolvable:$true] %s2467
          %2470 = dma.vmem_to_hbm [thread:$0]  %s2468, 128, %s2465, %s2453
        $region48: #{tpu_custom_call.1} parent=43 // pred_fallthru
          _
      $region44: #{tpu_custom_call.1} parent=5 // pred_fallthru
        _
      %p2471 = scmp.le.s32.totalorder 2, %s15
      // Predicated region
      $region49: #{tpu_custom_call.1} parent=5 // pred_check
        %p2472 = pneg %p2471
      $region50: #{tpu_custom_call.1} parent=5 // pred_check_branch
        %2474 = sbr.rel (%p2472) target = $region52
      $region51: #{tpu_custom_call.1} parent=5 // pred_region
        %s2475 = ssub.s32 %s15, 2
        // Predicated region
        $region53: #{tpu_custom_call.1} parent=51 // pred_check
          %p2476 = pneg %p180
        $region54: #{tpu_custom_call.1} parent=51 // pred_check_branch
          %2478 = sbr.rel (%p2476) target = $region56
        $region55: #{tpu_custom_call.1} parent=51 // pred_region
          %s2479 = sand.u32 %s165, 1
          %s2480 = scalar_lea.sflag [#allocation4], %s2479
          %s2481 = sand.u32 %s165, 1
          %s2482 = smul.addr %s2481, 8
          %s2483 = scalar_lea.vmem [#allocation3], %s2482
          %2484 = dma.done %s2480, 128
        $region56: #{tpu_custom_call.1} parent=51 // pred_fallthru
          _
      $region52: #{tpu_custom_call.1} parent=5 // pred_fallthru
        _
    $region6: #{tpu_custom_call.1} parent=1 // loop_footer
      %s19 = sadd.s32 1, %s15
    $region7: #{tpu_custom_call.1} parent=1 // loop_footer_branch
      %14 = sbr.rel target = $region3
    $region8: #{tpu_custom_call.1} parent=1 // loop_exit
      _
    %2485 = vsyncpa [#allocation4], 1
    %s2486 = scalar_lea.sflag [#allocation4], 1
    %2487 = vsyncpa %s2486, 1

</llo_original>
